<compile_context>
chip_gen: v5e
topology: v5e:2x2
jax: 0.10.0
libtpu: 0.0.40
codegen_flags: <defaults>
</compile_context>

<pallas_src>
import functools
import math

import jax
import jax.numpy as jnp
import numpy as np
from jax.experimental import pallas as pl
from jax.experimental.pallas import tpu as pltpu


def _round_up(x, m):
    return (x + m - 1) // m * m


# ----------------------------------------------------------------------------
# Pallas kernel: one (batch_tile, out_tile) tile of a KANLinear layer
# ----------------------------------------------------------------------------
def kan_linear_kernel(x_ref, w_ref, out_ref, slab_ref, *,
                      grid_size, spline_order, grid_range, compute_dtype):
    """x_ref: (BT, IN) f32; w_ref: ((G+K+1)*IN, OT) compute_dtype;
    out_ref: (BT, OT) f32; slab_ref: (BT, (G+K+1)*IN) f32 VMEM scratch."""
    G, K = grid_size, spline_order
    in_f = x_ref.shape[1]
    n_basis = G + K

    # The activation slab depends only on the batch tile -> build it once
    # (the out-tile grid axis is innermost and marked "arbitrary").
    @pl.when(pl.program_id(1) == 0)
    def _build_slab():
        x = x_ref[...]                                       # (BT, IN) f32

        # --- base path activation: SiLU(x) -----------------------------------
        slab_ref[:, n_basis * in_f:(n_basis + 1) * in_f] = x * jax.nn.sigmoid(x)

        # --- uniform knots baked as f32-exact compile-time constants ---------
        #   knot[j] = (j - K) * h + grid_range[0],  h = (hi - lo) / G
        h = np.float32((grid_range[1] - grid_range[0]) / G)
        knots = (np.arange(-K, G + K + 1, dtype=np.float32) * h
                 + np.float32(grid_range[0]))                # (G + 2K + 1,)
        kf = [float(v) for v in knots]

        # degree-0 indicator bases (x exactly at the top knot -> all zeros,
        # matching the PyTorch reference behavior).
        bases = [((x >= kf[j]) & (x < kf[j + 1])).astype(jnp.float32)
                 for j in range(G + 2 * K)]

        # Cox–de Boor recursion: denominators are knot differences, i.e.
        # compile-time reciprocal constants -> pure VALU multiplies, no
        # vector divisions through the EUP.
        for k in range(1, K + 1):
            new_bases = []
            for j in range(len(bases) - 1):
                inv_l = float(1.0 / (knots[j + k] - knots[j]))
                inv_r = float(1.0 / (knots[j + k + 1] - knots[j + 1]))
                left = (x - kf[j]) * inv_l * bases[j]
                right = (kf[j + k + 1] - x) * inv_r * bases[j + 1]
                new_bases.append(left + right)
            bases = new_bases
        # len(bases) == G + K; stream into the scratch slab (j-major,
        # feature-minor layout matching the fused weight rows).
        for j in range(n_basis):
            slab_ref[:, j * in_f:(j + 1) * in_f] = bases[j]

    # --- single fused MXU matmul: [bases | SiLU(x)] @ [spline ; base] --------
    acts = slab_ref[...].astype(compute_dtype)
    out_ref[...] = jnp.dot(acts, w_ref[...],
                           preferred_element_type=jnp.float32
                           ).astype(out_ref.dtype)


# ----------------------------------------------------------------------------
# One-time parameter prep (hoisted out of the forward hot path)
# ----------------------------------------------------------------------------
def prepare_kan_params(params, *, grid_size, spline_order,
                       compute_dtype=jnp.float32, lane=128):
    """Builds, per layer, a single fused weight matrix
        w_all[j*IN + i, o]       = spline_weight[o, i, j] * spline_scaler[o, i]
        w_all[(G+K)*IN + i, o]   = base_weight[o, i]
    padded along OUT to a multiple of 128 lanes and cast to compute_dtype."""
    GK = grid_size + spline_order
    prepared = []
    for _grid_t, base_w, spline_w, spline_scaler in params:
        out_f, in_f = base_w.shape
        scaled = spline_w * spline_scaler[:, :, None]              # (OUT, IN, GK)
        spline_rows = jnp.transpose(scaled, (2, 1, 0)).reshape(GK * in_f, out_f)
        w_all = jnp.concatenate([spline_rows, base_w.T], axis=0)   # ((GK+1)*IN, OUT)
        out_pad = _round_up(out_f, lane)
        if out_pad != out_f:
            w_all = jnp.pad(w_all, ((0, 0), (0, out_pad - out_f)))
        prepared.append((w_all.astype(compute_dtype), out_f))
    # TODO(synk): non-uniform grids produced by KANLinear.update_grid are not
    # supported (knots are baked as constants in the kernel).
    return prepared


# ----------------------------------------------------------------------------
# Forward wrappers
# ----------------------------------------------------------------------------
def kan_linear_forward(x, w_all, out_features, *, grid_size, spline_order,
                       grid_range=(-1.0, 1.0), compute_dtype=jnp.float32,
                       batch_tile=256, out_tile=256,
                       vmem_budget_bytes=24 * 1024 * 1024):
    batch, in_f = x.shape
    rows, out_pad = w_all.shape
    assert rows == (grid_size + spline_order + 1) * in_f

    x = x.astype(jnp.float32)
    wbytes = np.dtype(compute_dtype).itemsize

    # --- tile selection (conservative VMEM budget; fits v7x 64 MiB too) ------
    bt = min(_round_up(batch_tile, 8), _round_up(batch, 8))
    ot = min(out_tile, out_pad)
    while out_pad % ot != 0 or ot % 128 != 0:
        ot //= 2
        if ot < 128:
            ot = out_pad        # out_pad is always a multiple of 128
            break

    def vmem_est(bt_, ot_):
        return (2 * (bt_ * in_f * 4          # x tile (double buffered)
                     + rows * ot_ * wbytes   # fused weight tile
                     + bt_ * ot_ * 4)        # out tile
                + bt_ * rows * 4)            # slab scratch (single buffer)

    while (vmem_est(bt, ot) > vmem_budget_bytes and ot > 128
           and out_pad % (ot // 2) == 0):
        ot //= 2
    while vmem_est(bt, ot) > vmem_budget_bytes and bt > 8:
        bt = max(8, _round_up(bt // 2, 8))

    b_pad = _round_up(batch, bt)
    if b_pad != batch:
        x = jnp.pad(x, ((0, b_pad - batch), (0, 0)))

    grid = (b_pad // bt, out_pad // ot)

    kernel = functools.partial(kan_linear_kernel,
                               grid_size=grid_size, spline_order=spline_order,
                               grid_range=tuple(grid_range),
                               compute_dtype=compute_dtype)

    out = pl.pallas_call(
        kernel,
        out_shape=jax.ShapeDtypeStruct((b_pad, out_pad), jnp.float32),
        grid_spec=pltpu.PrefetchScalarGridSpec(
            num_scalar_prefetch=0,
            grid=grid,
            in_specs=[
                pl.BlockSpec((bt, in_f), lambda i, j: (i, 0)),
                pl.BlockSpec((rows, ot), lambda i, j: (0, j)),
            ],
            out_specs=pl.BlockSpec((bt, ot), lambda i, j: (i, j)),
            scratch_shapes=[pltpu.VMEM((bt, rows), jnp.float32)],
        ),
        compiler_params=pltpu.CompilerParams(
            # batch tiles independent (megacore-parallel); out tiles reuse the
            # slab cached at j == 0, so keep them sequential.
            dimension_semantics=("parallel", "arbitrary"),
            vmem_limit_bytes=int(min(48 * 1024 * 1024,
                                     max(16 * 1024 * 1024,
                                         2 * vmem_est(bt, ot)))),
        ),
    )(x, w_all)

    return out[:batch, :out_features]


def kan_forward(x, prepared_params, *, grid_size, spline_order,
                grid_range=(-1.0, 1.0), compute_dtype=jnp.float32,
                batch_tile=256, out_tile=256):
    # TODO(synk): for very small layer widths, fusing all layers into a single
    # pallas_call (activations kept in VMEM scratch) would remove per-layer
    # launch overhead and intermediate HBM round-trips.
    for w_all, out_f in prepared_params:
        x = kan_linear_forward(x, w_all, out_f,
                               grid_size=grid_size, spline_order=spline_order,
                               grid_range=grid_range,
                               compute_dtype=compute_dtype,
                               batch_tile=batch_tile, out_tile=out_tile)
    return x


# ----------------------------------------------------------------------------
# Deterministic parameter init (shapes match KANLinear.__init__)
# ----------------------------------------------------------------------------
def init_kan_params(key, layers_hidden, *, grid_size=5, spline_order=3,
                    grid_range=(-1.0, 1.0)):
    params = []
    h = (grid_range[1] - grid_range[0]) / grid_size
    knot_vals = (jnp.arange(-spline_order, grid_size + spline_order + 1,
                            dtype=jnp.float32) * h + grid_range[0])
    for in_f, out_f in zip(layers_hidden, layers_hidden[1:]):
        key, k1, k2, k3 = jax.random.split(key, 4)
        grid_t = jnp.tile(knot_vals[:, None], (1, in_f))      # (G+2K+1, IN)
        bound = 1.0 / math.sqrt(in_f)
        base_w = jax.random.uniform(k1, (out_f, in_f), jnp.float32,
                                    -bound, bound)
        spline_w = jax.random.uniform(
            k2, (out_f, in_f, grid_size + spline_order), jnp.float32,
            -0.1, 0.1)
        spline_scaler = jax.random.uniform(k3, (out_f, in_f), jnp.float32,
                                           -bound, bound)
        params.append((grid_t, base_w, spline_w, spline_scaler))
    return params


# ----------------------------------------------------------------------------
# Pure-JAX reference (mirrors the PyTorch forward) for correctness checking
# ----------------------------------------------------------------------------
def _ref_b_splines(x, grid_t, grid_size, spline_order):
    grid = grid_t.T                                           # (IN, G+2K+1)
    xe = x[:, :, None]
    bases = ((xe >= grid[None, :, :-1]) & (xe < grid[None, :, 1:])).astype(x.dtype)
    for k in range(1, spline_order + 1):
        bases = ((xe - grid[None, :, :-(k + 1)])
                 / (grid[None, :, k:-1] - grid[None, :, :-(k + 1)])
                 * bases[:, :, :-1]
                 + (grid[None, :, k + 1:] - xe)
                 / (grid[None, :, k + 1:] - grid[None, :, 1:-k])
                 * bases[:, :, 1:])
    return bases


def _ref_kan_forward(x, params, grid_size, spline_order):
    for grid_t, base_w, spline_w, spline_scaler in params:
        base_out = (x * jax.nn.sigmoid(x)) @ base_w.T
        bases = _ref_b_splines(x, grid_t, grid_size, spline_order)
        scaled = spline_w * spline_scaler[:, :, None]
        spline_out = bases.reshape(x.shape[0], -1) @ scaled.reshape(
            base_w.shape[0], -1).T
        x = base_out + spline_out
    return x


# ----------------------------------------------------------------------------
if __name__ == "__main__":
    grid_size = 5
    spline_order = 3
    grid_range = (-1.0, 1.0)
    layers_hidden = [16, 32, 8]
    batch = 32

    key = jax.random.PRNGKey(0)
    key, pkey, xkey = jax.random.split(key, 3)

    params = init_kan_params(pkey, layers_hidden, grid_size=grid_size,
                             spline_order=spline_order, grid_range=grid_range)
    x = jax.random.uniform(xkey, (batch, layers_hidden[0]), jnp.float32,
                           minval=-1.0, maxval=1.0)

    ref = _ref_kan_forward(x, params, grid_size, spline_order)

    # --- f32 MXU-operand path (strict check) ---------------------------------
    prep32 = prepare_kan_params(params, grid_size=grid_size,
                                spline_order=spline_order,
                                compute_dtype=jnp.float32)
    out32 = jax.block_until_ready(
        kan_forward(x, prep32, grid_size=grid_size, spline_order=spline_order,
                    grid_range=grid_range, compute_dtype=jnp.float32))
    np.testing.assert_allclose(np.asarray(out32), np.asarray(ref),
                               rtol=1e-4, atol=1e-4)

    # --- bf16 MXU-operand path (v6e/v7x fast path; loose check) --------------
    prep16 = prepare_kan_params(params, grid_size=grid_size,
                                spline_order=spline_order,
                                compute_dtype=jnp.bfloat16)
    out16 = jax.block_until_ready(
        kan_forward(x, prep16, grid_size=grid_size, spline_order=spline_order,
                    grid_range=grid_range, compute_dtype=jnp.bfloat16))
    np.testing.assert_allclose(np.asarray(out16), np.asarray(ref),
                               rtol=1e-1, atol=1e-1)

    print("KERNEL_OK")
</pallas_src>

<mosaic_0001>
module attributes {stable_mosaic.version = 11 : i64} {
  func.func @kan_linear_kernel(%arg0: i32, %arg1: i32, %arg2: memref<32x16xf32, #tpu.memory_space<vmem>>, %arg3: memref<144x128xf32, #tpu.memory_space<vmem>>, %arg4: memref<32x128xf32, #tpu.memory_space<vmem>>, %arg5: memref<32x144xf32, #tpu.memory_space<vmem>>) attributes {dimension_semantics = [#tpu.dimension_semantics<parallel>, #tpu.dimension_semantics<arbitrary>], iteration_bounds = array<i64: 1, 1>, scalar_prefetch = 0 : i64, scratch_operands = 1 : i64, tpu.core_type = #tpu.core_type<tc>, window_params = [{transform_indices = @transform_0, window_bounds = array<i64: 32, 16>}, {transform_indices = @transform_1, window_bounds = array<i64: 144, 128>}, {transform_indices = @transform_2, window_bounds = array<i64: 32, 128>}]} {
    %c0_i32 = arith.constant 0 : i32
    %0 = arith.cmpi eq, %arg1, %c0_i32 : i32
    %1 = arith.extui %0 : i1 to i32
    %c0_i32_0 = arith.constant 0 : i32
    %2 = arith.cmpi ne, %1, %c0_i32_0 : i32
    scf.if %2 {
      %c0_6 = arith.constant 0 : index
      %c0_7 = arith.constant 0 : index
      %7 = vector.load %arg2[%c0_6, %c0_7] : memref<32x16xf32, #tpu.memory_space<vmem>>, vector<32x16xf32>
      %8 = arith.negf %7 : vector<32x16xf32>
      %9 = math.exp %8 : vector<32x16xf32>
      %cst_8 = arith.constant 1.000000e+00 : f32
      %10 = vector.broadcast %cst_8 : f32 to vector<32x16xf32>
      %11 = arith.addf %10, %9 : vector<32x16xf32>
      %12 = arith.divf %10, %11 : vector<32x16xf32>
      %13 = arith.mulf %7, %12 : vector<32x16xf32>
      %c0_9 = arith.constant 0 : index
      %c128 = arith.constant 128 : index
      %14 = vector.load %arg5[%c0_9, %c128] : memref<32x144xf32, #tpu.memory_space<vmem>>, vector<32x16xf32>
      tpu.vector_store %arg5[%c0_9, %c128], %13 {strides = array<i32>} : memref<32x144xf32, #tpu.memory_space<vmem>>, vector<32x16xf32>,
      %cst_10 = arith.constant -2.200000e+00 : f32
      %15 = vector.broadcast %cst_10 : f32 to vector<32x16xf32>
      %16 = arith.cmpf oge, %7, %15 : vector<32x16xf32>
      %cst_11 = arith.constant -1.800000e+00 : f32
      %17 = vector.broadcast %cst_11 : f32 to vector<32x16xf32>
      %18 = arith.cmpf olt, %7, %17 : vector<32x16xf32>
      %19 = arith.andi %16, %18 : vector<32x16xi1>
      %20 = arith.extui %19 : vector<32x16xi1> to vector<32x16xi32>
      %21 = arith.sitofp %20 : vector<32x16xi32> to vector<32x16xf32>
      %cst_12 = arith.constant -1.800000e+00 : f32
      %22 = vector.broadcast %cst_12 : f32 to vector<32x16xf32>
      %23 = arith.cmpf oge, %7, %22 : vector<32x16xf32>
      %cst_13 = arith.constant -1.400000e+00 : f32
      %24 = vector.broadcast %cst_13 : f32 to vector<32x16xf32>
      %25 = arith.cmpf olt, %7, %24 : vector<32x16xf32>
      %26 = arith.andi %23, %25 : vector<32x16xi1>
      %27 = arith.extui %26 : vector<32x16xi1> to vector<32x16xi32>
      %28 = arith.sitofp %27 : vector<32x16xi32> to vector<32x16xf32>
      %cst_14 = arith.constant -1.400000e+00 : f32
      %29 = vector.broadcast %cst_14 : f32 to vector<32x16xf32>
      %30 = arith.cmpf oge, %7, %29 : vector<32x16xf32>
      %cst_15 = arith.constant -1.000000e+00 : f32
      %31 = vector.broadcast %cst_15 : f32 to vector<32x16xf32>
      %32 = arith.cmpf olt, %7, %31 : vector<32x16xf32>
      %33 = arith.andi %30, %32 : vector<32x16xi1>
      %34 = arith.extui %33 : vector<32x16xi1> to vector<32x16xi32>
      %35 = arith.sitofp %34 : vector<32x16xi32> to vector<32x16xf32>
      %cst_16 = arith.constant -1.000000e+00 : f32
      %36 = vector.broadcast %cst_16 : f32 to vector<32x16xf32>
      %37 = arith.cmpf oge, %7, %36 : vector<32x16xf32>
      %cst_17 = arith.constant -6.000000e-01 : f32
      %38 = vector.broadcast %cst_17 : f32 to vector<32x16xf32>
      %39 = arith.cmpf olt, %7, %38 : vector<32x16xf32>
      %40 = arith.andi %37, %39 : vector<32x16xi1>
      %41 = arith.extui %40 : vector<32x16xi1> to vector<32x16xi32>
      %42 = arith.sitofp %41 : vector<32x16xi32> to vector<32x16xf32>
      %cst_18 = arith.constant -6.000000e-01 : f32
      %43 = vector.broadcast %cst_18 : f32 to vector<32x16xf32>
      %44 = arith.cmpf oge, %7, %43 : vector<32x16xf32>
      %cst_19 = arith.constant -0.199999988 : f32
      %45 = vector.broadcast %cst_19 : f32 to vector<32x16xf32>
      %46 = arith.cmpf olt, %7, %45 : vector<32x16xf32>
      %47 = arith.andi %44, %46 : vector<32x16xi1>
      %48 = arith.extui %47 : vector<32x16xi1> to vector<32x16xi32>
      %49 = arith.sitofp %48 : vector<32x16xi32> to vector<32x16xf32>
      %cst_20 = arith.constant -0.199999988 : f32
      %50 = vector.broadcast %cst_20 : f32 to vector<32x16xf32>
      %51 = arith.cmpf oge, %7, %50 : vector<32x16xf32>
      %cst_21 = arith.constant 0.200000048 : f32
      %52 = vector.broadcast %cst_21 : f32 to vector<32x16xf32>
      %53 = arith.cmpf olt, %7, %52 : vector<32x16xf32>
      %54 = arith.andi %51, %53 : vector<32x16xi1>
      %55 = arith.extui %54 : vector<32x16xi1> to vector<32x16xi32>
      %56 = arith.sitofp %55 : vector<32x16xi32> to vector<32x16xf32>
      %cst_22 = arith.constant 0.200000048 : f32
      %57 = vector.broadcast %cst_22 : f32 to vector<32x16xf32>
      %58 = arith.cmpf oge, %7, %57 : vector<32x16xf32>
      %cst_23 = arith.constant 6.000000e-01 : f32
      %59 = vector.broadcast %cst_23 : f32 to vector<32x16xf32>
      %60 = arith.cmpf olt, %7, %59 : vector<32x16xf32>
      %61 = arith.andi %58, %60 : vector<32x16xi1>
      %62 = arith.extui %61 : vector<32x16xi1> to vector<32x16xi32>
      %63 = arith.sitofp %62 : vector<32x16xi32> to vector<32x16xf32>
      %cst_24 = arith.constant 6.000000e-01 : f32
      %64 = vector.broadcast %cst_24 : f32 to vector<32x16xf32>
      %65 = arith.cmpf oge, %7, %64 : vector<32x16xf32>
      %cst_25 = arith.constant 1.000000e+00 : f32
      %66 = vector.broadcast %cst_25 : f32 to vector<32x16xf32>
      %67 = arith.cmpf olt, %7, %66 : vector<32x16xf32>
      %68 = arith.andi %65, %67 : vector<32x16xi1>
      %69 = arith.extui %68 : vector<32x16xi1> to vector<32x16xi32>
      %70 = arith.sitofp %69 : vector<32x16xi32> to vector<32x16xf32>
      %cst_26 = arith.constant 1.000000e+00 : f32
      %71 = vector.broadcast %cst_26 : f32 to vector<32x16xf32>
      %72 = arith.cmpf oge, %7, %71 : vector<32x16xf32>
      %cst_27 = arith.constant 1.4000001 : f32
      %73 = vector.broadcast %cst_27 : f32 to vector<32x16xf32>
      %74 = arith.cmpf olt, %7, %73 : vector<32x16xf32>
      %75 = arith.andi %72, %74 : vector<32x16xi1>
      %76 = arith.extui %75 : vector<32x16xi1> to vector<32x16xi32>
      %77 = arith.sitofp %76 : vector<32x16xi32> to vector<32x16xf32>
      %cst_28 = arith.constant 1.4000001 : f32
      %78 = vector.broadcast %cst_28 : f32 to vector<32x16xf32>
      %79 = arith.cmpf oge, %7, %78 : vector<32x16xf32>
      %cst_29 = arith.constant 1.800000e+00 : f32
      %80 = vector.broadcast %cst_29 : f32 to vector<32x16xf32>
      %81 = arith.cmpf olt, %7, %80 : vector<32x16xf32>
      %82 = arith.andi %79, %81 : vector<32x16xi1>
      %83 = arith.extui %82 : vector<32x16xi1> to vector<32x16xi32>
      %84 = arith.sitofp %83 : vector<32x16xi32> to vector<32x16xf32>
      %cst_30 = arith.constant 1.800000e+00 : f32
      %85 = vector.broadcast %cst_30 : f32 to vector<32x16xf32>
      %86 = arith.cmpf oge, %7, %85 : vector<32x16xf32>
      %cst_31 = arith.constant 2.200000e+00 : f32
      %87 = vector.broadcast %cst_31 : f32 to vector<32x16xf32>
      %88 = arith.cmpf olt, %7, %87 : vector<32x16xf32>
      %89 = arith.andi %86, %88 : vector<32x16xi1>
      %90 = arith.extui %89 : vector<32x16xi1> to vector<32x16xi32>
      %91 = arith.sitofp %90 : vector<32x16xi32> to vector<32x16xf32>
      %cst_32 = arith.constant -2.200000e+00 : f32
      %92 = vector.broadcast %cst_32 : f32 to vector<32x16xf32>
      %93 = arith.subf %7, %92 : vector<32x16xf32>
      %cst_33 = arith.constant 2.49999952 : f32
      %94 = vector.broadcast %cst_33 : f32 to vector<32x16xf32>
      %95 = arith.mulf %93, %94 : vector<32x16xf32>
      %96 = arith.mulf %95, %21 : vector<32x16xf32>
      %cst_34 = arith.constant -1.400000e+00 : f32
      %97 = vector.broadcast %cst_34 : f32 to vector<32x16xf32>
      %98 = arith.subf %97, %7 : vector<32x16xf32>
      %cst_35 = arith.constant 2.50000024 : f32
      %99 = vector.broadcast %cst_35 : f32 to vector<32x16xf32>
      %100 = arith.mulf %98, %99 : vector<32x16xf32>
      %101 = arith.mulf %100, %28 : vector<32x16xf32>
      %102 = arith.addf %96, %101 : vector<32x16xf32>
      %cst_36 = arith.constant -1.800000e+00 : f32
      %103 = vector.broadcast %cst_36 : f32 to vector<32x16xf32>
      %104 = arith.subf %7, %103 : vector<32x16xf32>
      %cst_37 = arith.constant 2.50000024 : f32
      %105 = vector.broadcast %cst_37 : f32 to vector<32x16xf32>
      %106 = arith.mulf %104, %105 : vector<32x16xf32>
      %107 = arith.mulf %106, %28 : vector<32x16xf32>
      %cst_38 = arith.constant -1.000000e+00 : f32
      %108 = vector.broadcast %cst_38 : f32 to vector<32x16xf32>
      %109 = arith.subf %108, %7 : vector<32x16xf32>
      %cst_39 = arith.constant 2.50000024 : f32
      %110 = vector.broadcast %cst_39 : f32 to vector<32x16xf32>
      %111 = arith.mulf %109, %110 : vector<32x16xf32>
      %112 = arith.mulf %111, %35 : vector<32x16xf32>
      %113 = arith.addf %107, %112 : vector<32x16xf32>
      %cst_40 = arith.constant -1.400000e+00 : f32
      %114 = vector.broadcast %cst_40 : f32 to vector<32x16xf32>
      %115 = arith.subf %7, %114 : vector<32x16xf32>
      %cst_41 = arith.constant 2.50000024 : f32
      %116 = vector.broadcast %cst_41 : f32 to vector<32x16xf32>
      %117 = arith.mulf %115, %116 : vector<32x16xf32>
      %118 = arith.mulf %117, %35 : vector<32x16xf32>
      %cst_42 = arith.constant -6.000000e-01 : f32
      %119 = vector.broadcast %cst_42 : f32 to vector<32x16xf32>
      %120 = arith.subf %119, %7 : vector<32x16xf32>
      %cst_43 = arith.constant 2.50000024 : f32
      %121 = vector.broadcast %cst_43 : f32 to vector<32x16xf32>
      %122 = arith.mulf %120, %121 : vector<32x16xf32>
      %123 = arith.mulf %122, %42 : vector<32x16xf32>
      %124 = arith.addf %118, %123 : vector<32x16xf32>
      %cst_44 = arith.constant -1.000000e+00 : f32
      %125 = vector.broadcast %cst_44 : f32 to vector<32x16xf32>
      %126 = arith.subf %7, %125 : vector<32x16xf32>
      %cst_45 = arith.constant 2.50000024 : f32
      %127 = vector.broadcast %cst_45 : f32 to vector<32x16xf32>
      %128 = arith.mulf %126, %127 : vector<32x16xf32>
      %129 = arith.mulf %128, %42 : vector<32x16xf32>
      %cst_46 = arith.constant -0.199999988 : f32
      %130 = vector.broadcast %cst_46 : f32 to vector<32x16xf32>
      %131 = arith.subf %130, %7 : vector<32x16xf32>
      %cst_47 = arith.constant 2.49999976 : f32
      %132 = vector.broadcast %cst_47 : f32 to vector<32x16xf32>
      %133 = arith.mulf %131, %132 : vector<32x16xf32>
      %134 = arith.mulf %133, %49 : vector<32x16xf32>
      %135 = arith.addf %129, %134 : vector<32x16xf32>
      %cst_48 = arith.constant -6.000000e-01 : f32
      %136 = vector.broadcast %cst_48 : f32 to vector<32x16xf32>
      %137 = arith.subf %7, %136 : vector<32x16xf32>
      %cst_49 = arith.constant 2.49999976 : f32
      %138 = vector.broadcast %cst_49 : f32 to vector<32x16xf32>
      %139 = arith.mulf %137, %138 : vector<32x16xf32>
      %140 = arith.mulf %139, %49 : vector<32x16xf32>
      %cst_50 = arith.constant 0.200000048 : f32
      %141 = vector.broadcast %cst_50 : f32 to vector<32x16xf32>
      %142 = arith.subf %141, %7 : vector<32x16xf32>
      %cst_51 = arith.constant 2.49999976 : f32
      %143 = vector.broadcast %cst_51 : f32 to vector<32x16xf32>
      %144 = arith.mulf %142, %143 : vector<32x16xf32>
      %145 = arith.mulf %144, %56 : vector<32x16xf32>
      %146 = arith.addf %140, %145 : vector<32x16xf32>
      %cst_52 = arith.constant -0.199999988 : f32
      %147 = vector.broadcast %cst_52 : f32 to vector<32x16xf32>
      %148 = arith.subf %7, %147 : vector<32x16xf32>
      %cst_53 = arith.constant 2.49999976 : f32
      %149 = vector.broadcast %cst_53 : f32 to vector<32x16xf32>
      %150 = arith.mulf %148, %149 : vector<32x16xf32>
      %151 = arith.mulf %150, %56 : vector<32x16xf32>
      %cst_54 = arith.constant 6.000000e-01 : f32
      %152 = vector.broadcast %cst_54 : f32 to vector<32x16xf32>
      %153 = arith.subf %152, %7 : vector<32x16xf32>
      %cst_55 = arith.constant 2.50000024 : f32
      %154 = vector.broadcast %cst_55 : f32 to vector<32x16xf32>
      %155 = arith.mulf %153, %154 : vector<32x16xf32>
      %156 = arith.mulf %155, %63 : vector<32x16xf32>
      %157 = arith.addf %151, %156 : vector<32x16xf32>
      %cst_56 = arith.constant 0.200000048 : f32
      %158 = vector.broadcast %cst_56 : f32 to vector<32x16xf32>
      %159 = arith.subf %7, %158 : vector<32x16xf32>
      %cst_57 = arith.constant 2.50000024 : f32
      %160 = vector.broadcast %cst_57 : f32 to vector<32x16xf32>
      %161 = arith.mulf %159, %160 : vector<32x16xf32>
      %162 = arith.mulf %161, %63 : vector<32x16xf32>
      %cst_58 = arith.constant 1.000000e+00 : f32
      %163 = vector.broadcast %cst_58 : f32 to vector<32x16xf32>
      %164 = arith.subf %163, %7 : vector<32x16xf32>
      %cst_59 = arith.constant 2.50000024 : f32
      %165 = vector.broadcast %cst_59 : f32 to vector<32x16xf32>
      %166 = arith.mulf %164, %165 : vector<32x16xf32>
      %167 = arith.mulf %166, %70 : vector<32x16xf32>
      %168 = arith.addf %162, %167 : vector<32x16xf32>
      %cst_60 = arith.constant 6.000000e-01 : f32
      %169 = vector.broadcast %cst_60 : f32 to vector<32x16xf32>
      %170 = arith.subf %7, %169 : vector<32x16xf32>
      %cst_61 = arith.constant 2.50000024 : f32
      %171 = vector.broadcast %cst_61 : f32 to vector<32x16xf32>
      %172 = arith.mulf %170, %171 : vector<32x16xf32>
      %173 = arith.mulf %172, %70 : vector<32x16xf32>
      %cst_62 = arith.constant 1.4000001 : f32
      %174 = vector.broadcast %cst_62 : f32 to vector<32x16xf32>
      %175 = arith.subf %174, %7 : vector<32x16xf32>
      %cst_63 = arith.constant 2.49999952 : f32
      %176 = vector.broadcast %cst_63 : f32 to vector<32x16xf32>
      %177 = arith.mulf %175, %176 : vector<32x16xf32>
      %178 = arith.mulf %177, %77 : vector<32x16xf32>
      %179 = arith.addf %173, %178 : vector<32x16xf32>
      %cst_64 = arith.constant 1.000000e+00 : f32
      %180 = vector.broadcast %cst_64 : f32 to vector<32x16xf32>
      %181 = arith.subf %7, %180 : vector<32x16xf32>
      %cst_65 = arith.constant 2.49999952 : f32
      %182 = vector.broadcast %cst_65 : f32 to vector<32x16xf32>
      %183 = arith.mulf %181, %182 : vector<32x16xf32>
      %184 = arith.mulf %183, %77 : vector<32x16xf32>
      %cst_66 = arith.constant 1.800000e+00 : f32
      %185 = vector.broadcast %cst_66 : f32 to vector<32x16xf32>
      %186 = arith.subf %185, %7 : vector<32x16xf32>
      %cst_67 = arith.constant 2.50000095 : f32
      %187 = vector.broadcast %cst_67 : f32 to vector<32x16xf32>
      %188 = arith.mulf %186, %187 : vector<32x16xf32>
      %189 = arith.mulf %188, %84 : vector<32x16xf32>
      %190 = arith.addf %184, %189 : vector<32x16xf32>
      %cst_68 = arith.constant 1.4000001 : f32
      %191 = vector.broadcast %cst_68 : f32 to vector<32x16xf32>
      %192 = arith.subf %7, %191 : vector<32x16xf32>
      %cst_69 = arith.constant 2.50000095 : f32
      %193 = vector.broadcast %cst_69 : f32 to vector<32x16xf32>
      %194 = arith.mulf %192, %193 : vector<32x16xf32>
      %195 = arith.mulf %194, %84 : vector<32x16xf32>
      %cst_70 = arith.constant 2.200000e+00 : f32
      %196 = vector.broadcast %cst_70 : f32 to vector<32x16xf32>
      %197 = arith.subf %196, %7 : vector<32x16xf32>
      %cst_71 = arith.constant 2.49999952 : f32
      %198 = vector.broadcast %cst_71 : f32 to vector<32x16xf32>
      %199 = arith.mulf %197, %198 : vector<32x16xf32>
      %200 = arith.mulf %199, %91 : vector<32x16xf32>
      %201 = arith.addf %195, %200 : vector<32x16xf32>
      %cst_72 = arith.constant -2.200000e+00 : f32
      %202 = vector.broadcast %cst_72 : f32 to vector<32x16xf32>
      %203 = arith.subf %7, %202 : vector<32x16xf32>
      %cst_73 = arith.constant 1.24999988 : f32
      %204 = vector.broadcast %cst_73 : f32 to vector<32x16xf32>
      %205 = arith.mulf %203, %204 : vector<32x16xf32>
      %206 = arith.mulf %205, %102 : vector<32x16xf32>
      %cst_74 = arith.constant -1.000000e+00 : f32
      %207 = vector.broadcast %cst_74 : f32 to vector<32x16xf32>
      %208 = arith.subf %207, %7 : vector<32x16xf32>
      %cst_75 = arith.constant 1.25000012 : f32
      %209 = vector.broadcast %cst_75 : f32 to vector<32x16xf32>
      %210 = arith.mulf %208, %209 : vector<32x16xf32>
      %211 = arith.mulf %210, %113 : vector<32x16xf32>
      %212 = arith.addf %206, %211 : vector<32x16xf32>
      %cst_76 = arith.constant -1.800000e+00 : f32
      %213 = vector.broadcast %cst_76 : f32 to vector<32x16xf32>
      %214 = arith.subf %7, %213 : vector<32x16xf32>
      %cst_77 = arith.constant 1.25000012 : f32
      %215 = vector.broadcast %cst_77 : f32 to vector<32x16xf32>
      %216 = arith.mulf %214, %215 : vector<32x16xf32>
      %217 = arith.mulf %216, %113 : vector<32x16xf32>
      %cst_78 = arith.constant -6.000000e-01 : f32
      %218 = vector.broadcast %cst_78 : f32 to vector<32x16xf32>
      %219 = arith.subf %218, %7 : vector<32x16xf32>
      %cst_79 = arith.constant 1.25000012 : f32
      %220 = vector.broadcast %cst_79 : f32 to vector<32x16xf32>
      %221 = arith.mulf %219, %220 : vector<32x16xf32>
      %222 = arith.mulf %221, %124 : vector<32x16xf32>
      %223 = arith.addf %217, %222 : vector<32x16xf32>
      %cst_80 = arith.constant -1.400000e+00 : f32
      %224 = vector.broadcast %cst_80 : f32 to vector<32x16xf32>
      %225 = arith.subf %7, %224 : vector<32x16xf32>
      %cst_81 = arith.constant 1.25000012 : f32
      %226 = vector.broadcast %cst_81 : f32 to vector<32x16xf32>
      %227 = arith.mulf %225, %226 : vector<32x16xf32>
      %228 = arith.mulf %227, %124 : vector<32x16xf32>
      %cst_82 = arith.constant -0.199999988 : f32
      %229 = vector.broadcast %cst_82 : f32 to vector<32x16xf32>
      %230 = arith.subf %229, %7 : vector<32x16xf32>
      %cst_83 = arith.constant 1.250000e+00 : f32
      %231 = vector.broadcast %cst_83 : f32 to vector<32x16xf32>
      %232 = arith.mulf %230, %231 : vector<32x16xf32>
      %233 = arith.mulf %232, %135 : vector<32x16xf32>
      %234 = arith.addf %228, %233 : vector<32x16xf32>
      %cst_84 = arith.constant -1.000000e+00 : f32
      %235 = vector.broadcast %cst_84 : f32 to vector<32x16xf32>
      %236 = arith.subf %7, %235 : vector<32x16xf32>
      %cst_85 = arith.constant 1.250000e+00 : f32
      %237 = vector.broadcast %cst_85 : f32 to vector<32x16xf32>
      %238 = arith.mulf %236, %237 : vector<32x16xf32>
      %239 = arith.mulf %238, %135 : vector<32x16xf32>
      %cst_86 = arith.constant 0.200000048 : f32
      %240 = vector.broadcast %cst_86 : f32 to vector<32x16xf32>
      %241 = arith.subf %240, %7 : vector<32x16xf32>
      %cst_87 = arith.constant 1.24999988 : f32
      %242 = vector.broadcast %cst_87 : f32 to vector<32x16xf32>
      %243 = arith.mulf %241, %242 : vector<32x16xf32>
      %244 = arith.mulf %243, %146 : vector<32x16xf32>
      %245 = arith.addf %239, %244 : vector<32x16xf32>
      %cst_88 = arith.constant -6.000000e-01 : f32
      %246 = vector.broadcast %cst_88 : f32 to vector<32x16xf32>
      %247 = arith.subf %7, %246 : vector<32x16xf32>
      %cst_89 = arith.constant 1.24999988 : f32
      %248 = vector.broadcast %cst_89 : f32 to vector<32x16xf32>
      %249 = arith.mulf %247, %248 : vector<32x16xf32>
      %250 = arith.mulf %249, %146 : vector<32x16xf32>
      %cst_90 = arith.constant 6.000000e-01 : f32
      %251 = vector.broadcast %cst_90 : f32 to vector<32x16xf32>
      %252 = arith.subf %251, %7 : vector<32x16xf32>
      %cst_91 = arith.constant 1.250000e+00 : f32
      %253 = vector.broadcast %cst_91 : f32 to vector<32x16xf32>
      %254 = arith.mulf %252, %253 : vector<32x16xf32>
      %255 = arith.mulf %254, %157 : vector<32x16xf32>
      %256 = arith.addf %250, %255 : vector<32x16xf32>
      %cst_92 = arith.constant -0.199999988 : f32
      %257 = vector.broadcast %cst_92 : f32 to vector<32x16xf32>
      %258 = arith.subf %7, %257 : vector<32x16xf32>
      %cst_93 = arith.constant 1.250000e+00 : f32
      %259 = vector.broadcast %cst_93 : f32 to vector<32x16xf32>
      %260 = arith.mulf %258, %259 : vector<32x16xf32>
      %261 = arith.mulf %260, %157 : vector<32x16xf32>
      %cst_94 = arith.constant 1.000000e+00 : f32
      %262 = vector.broadcast %cst_94 : f32 to vector<32x16xf32>
      %263 = arith.subf %262, %7 : vector<32x16xf32>
      %cst_95 = arith.constant 1.25000012 : f32
      %264 = vector.broadcast %cst_95 : f32 to vector<32x16xf32>
      %265 = arith.mulf %263, %264 : vector<32x16xf32>
      %266 = arith.mulf %265, %168 : vector<32x16xf32>
      %267 = arith.addf %261, %266 : vector<32x16xf32>
      %cst_96 = arith.constant 0.200000048 : f32
      %268 = vector.broadcast %cst_96 : f32 to vector<32x16xf32>
      %269 = arith.subf %7, %268 : vector<32x16xf32>
      %cst_97 = arith.constant 1.25000012 : f32
      %270 = vector.broadcast %cst_97 : f32 to vector<32x16xf32>
      %271 = arith.mulf %269, %270 : vector<32x16xf32>
      %272 = arith.mulf %271, %168 : vector<32x16xf32>
      %cst_98 = arith.constant 1.4000001 : f32
      %273 = vector.broadcast %cst_98 : f32 to vector<32x16xf32>
      %274 = arith.subf %273, %7 : vector<32x16xf32>
      %cst_99 = arith.constant 1.24999988 : f32
      %275 = vector.broadcast %cst_99 : f32 to vector<32x16xf32>
      %276 = arith.mulf %274, %275 : vector<32x16xf32>
      %277 = arith.mulf %276, %179 : vector<32x16xf32>
      %278 = arith.addf %272, %277 : vector<32x16xf32>
      %cst_100 = arith.constant 6.000000e-01 : f32
      %279 = vector.broadcast %cst_100 : f32 to vector<32x16xf32>
      %280 = arith.subf %7, %279 : vector<32x16xf32>
      %cst_101 = arith.constant 1.24999988 : f32
      %281 = vector.broadcast %cst_101 : f32 to vector<32x16xf32>
      %282 = arith.mulf %280, %281 : vector<32x16xf32>
      %283 = arith.mulf %282, %179 : vector<32x16xf32>
      %cst_102 = arith.constant 1.800000e+00 : f32
      %284 = vector.broadcast %cst_102 : f32 to vector<32x16xf32>
      %285 = arith.subf %284, %7 : vector<32x16xf32>
      %cst_103 = arith.constant 1.25000012 : f32
      %286 = vector.broadcast %cst_103 : f32 to vector<32x16xf32>
      %287 = arith.mulf %285, %286 : vector<32x16xf32>
      %288 = arith.mulf %287, %190 : vector<32x16xf32>
      %289 = arith.addf %283, %288 : vector<32x16xf32>
      %cst_104 = arith.constant 1.000000e+00 : f32
      %290 = vector.broadcast %cst_104 : f32 to vector<32x16xf32>
      %291 = arith.subf %7, %290 : vector<32x16xf32>
      %cst_105 = arith.constant 1.25000012 : f32
      %292 = vector.broadcast %cst_105 : f32 to vector<32x16xf32>
      %293 = arith.mulf %291, %292 : vector<32x16xf32>
      %294 = arith.mulf %293, %190 : vector<32x16xf32>
      %cst_106 = arith.constant 2.200000e+00 : f32
      %295 = vector.broadcast %cst_106 : f32 to vector<32x16xf32>
      %296 = arith.subf %295, %7 : vector<32x16xf32>
      %cst_107 = arith.constant 1.25000012 : f32
      %297 = vector.broadcast %cst_107 : f32 to vector<32x16xf32>
      %298 = arith.mulf %296, %297 : vector<32x16xf32>
      %299 = arith.mulf %298, %201 : vector<32x16xf32>
      %300 = arith.addf %294, %299 : vector<32x16xf32>
      %cst_108 = arith.constant -2.200000e+00 : f32
      %301 = vector.broadcast %cst_108 : f32 to vector<32x16xf32>
      %302 = arith.subf %7, %301 : vector<32x16xf32>
      %cst_109 = arith.constant 0.833333313 : f32
      %303 = vector.broadcast %cst_109 : f32 to vector<32x16xf32>
      %304 = arith.mulf %302, %303 : vector<32x16xf32>
      %305 = arith.mulf %304, %212 : vector<32x16xf32>
      %cst_110 = arith.constant -6.000000e-01 : f32
      %306 = vector.broadcast %cst_110 : f32 to vector<32x16xf32>
      %307 = arith.subf %306, %7 : vector<32x16xf32>
      %cst_111 = arith.constant 0.833333373 : f32
      %308 = vector.broadcast %cst_111 : f32 to vector<32x16xf32>
      %309 = arith.mulf %307, %308 : vector<32x16xf32>
      %310 = arith.mulf %309, %223 : vector<32x16xf32>
      %311 = arith.addf %305, %310 : vector<32x16xf32>
      %cst_112 = arith.constant -1.800000e+00 : f32
      %312 = vector.broadcast %cst_112 : f32 to vector<32x16xf32>
      %313 = arith.subf %7, %312 : vector<32x16xf32>
      %cst_113 = arith.constant 0.833333373 : f32
      %314 = vector.broadcast %cst_113 : f32 to vector<32x16xf32>
      %315 = arith.mulf %313, %314 : vector<32x16xf32>
      %316 = arith.mulf %315, %223 : vector<32x16xf32>
      %cst_114 = arith.constant -0.199999988 : f32
      %317 = vector.broadcast %cst_114 : f32 to vector<32x16xf32>
      %318 = arith.subf %317, %7 : vector<32x16xf32>
      %cst_115 = arith.constant 0.833333313 : f32
      %319 = vector.broadcast %cst_115 : f32 to vector<32x16xf32>
      %320 = arith.mulf %318, %319 : vector<32x16xf32>
      %321 = arith.mulf %320, %234 : vector<32x16xf32>
      %322 = arith.addf %316, %321 : vector<32x16xf32>
      %cst_116 = arith.constant -1.400000e+00 : f32
      %323 = vector.broadcast %cst_116 : f32 to vector<32x16xf32>
      %324 = arith.subf %7, %323 : vector<32x16xf32>
      %cst_117 = arith.constant 0.833333313 : f32
      %325 = vector.broadcast %cst_117 : f32 to vector<32x16xf32>
      %326 = arith.mulf %324, %325 : vector<32x16xf32>
      %327 = arith.mulf %326, %234 : vector<32x16xf32>
      %cst_118 = arith.constant 0.200000048 : f32
      %328 = vector.broadcast %cst_118 : f32 to vector<32x16xf32>
      %329 = arith.subf %328, %7 : vector<32x16xf32>
      %cst_119 = arith.constant 0.833333313 : f32
      %330 = vector.broadcast %cst_119 : f32 to vector<32x16xf32>
      %331 = arith.mulf %329, %330 : vector<32x16xf32>
      %332 = arith.mulf %331, %245 : vector<32x16xf32>
      %333 = arith.addf %327, %332 : vector<32x16xf32>
      %cst_120 = arith.constant -1.000000e+00 : f32
      %334 = vector.broadcast %cst_120 : f32 to vector<32x16xf32>
      %335 = arith.subf %7, %334 : vector<32x16xf32>
      %cst_121 = arith.constant 0.833333313 : f32
      %336 = vector.broadcast %cst_121 : f32 to vector<32x16xf32>
      %337 = arith.mulf %335, %336 : vector<32x16xf32>
      %338 = arith.mulf %337, %245 : vector<32x16xf32>
      %cst_122 = arith.constant 6.000000e-01 : f32
      %339 = vector.broadcast %cst_122 : f32 to vector<32x16xf32>
      %340 = arith.subf %339, %7 : vector<32x16xf32>
      %cst_123 = arith.constant 0.833333313 : f32
      %341 = vector.broadcast %cst_123 : f32 to vector<32x16xf32>
      %342 = arith.mulf %340, %341 : vector<32x16xf32>
      %343 = arith.mulf %342, %256 : vector<32x16xf32>
      %344 = arith.addf %338, %343 : vector<32x16xf32>
      %cst_124 = arith.constant -6.000000e-01 : f32
      %345 = vector.broadcast %cst_124 : f32 to vector<32x16xf32>
      %346 = arith.subf %7, %345 : vector<32x16xf32>
      %cst_125 = arith.constant 0.833333313 : f32
      %347 = vector.broadcast %cst_125 : f32 to vector<32x16xf32>
      %348 = arith.mulf %346, %347 : vector<32x16xf32>
      %349 = arith.mulf %348, %256 : vector<32x16xf32>
      %cst_126 = arith.constant 1.000000e+00 : f32
      %350 = vector.broadcast %cst_126 : f32 to vector<32x16xf32>
      %351 = arith.subf %350, %7 : vector<32x16xf32>
      %cst_127 = arith.constant 0.833333313 : f32
      %352 = vector.broadcast %cst_127 : f32 to vector<32x16xf32>
      %353 = arith.mulf %351, %352 : vector<32x16xf32>
      %354 = arith.mulf %353, %267 : vector<32x16xf32>
      %355 = arith.addf %349, %354 : vector<32x16xf32>
      %cst_128 = arith.constant -0.199999988 : f32
      %356 = vector.broadcast %cst_128 : f32 to vector<32x16xf32>
      %357 = arith.subf %7, %356 : vector<32x16xf32>
      %cst_129 = arith.constant 0.833333313 : f32
      %358 = vector.broadcast %cst_129 : f32 to vector<32x16xf32>
      %359 = arith.mulf %357, %358 : vector<32x16xf32>
      %360 = arith.mulf %359, %267 : vector<32x16xf32>
      %cst_130 = arith.constant 1.4000001 : f32
      %361 = vector.broadcast %cst_130 : f32 to vector<32x16xf32>
      %362 = arith.subf %361, %7 : vector<32x16xf32>
      %cst_131 = arith.constant 0.833333313 : f32
      %363 = vector.broadcast %cst_131 : f32 to vector<32x16xf32>
      %364 = arith.mulf %362, %363 : vector<32x16xf32>
      %365 = arith.mulf %364, %278 : vector<32x16xf32>
      %366 = arith.addf %360, %365 : vector<32x16xf32>
      %cst_132 = arith.constant 0.200000048 : f32
      %367 = vector.broadcast %cst_132 : f32 to vector<32x16xf32>
      %368 = arith.subf %7, %367 : vector<32x16xf32>
      %cst_133 = arith.constant 0.833333313 : f32
      %369 = vector.broadcast %cst_133 : f32 to vector<32x16xf32>
      %370 = arith.mulf %368, %369 : vector<32x16xf32>
      %371 = arith.mulf %370, %278 : vector<32x16xf32>
      %cst_134 = arith.constant 1.800000e+00 : f32
      %372 = vector.broadcast %cst_134 : f32 to vector<32x16xf32>
      %373 = arith.subf %372, %7 : vector<32x16xf32>
      %cst_135 = arith.constant 0.833333373 : f32
      %374 = vector.broadcast %cst_135 : f32 to vector<32x16xf32>
      %375 = arith.mulf %373, %374 : vector<32x16xf32>
      %376 = arith.mulf %375, %289 : vector<32x16xf32>
      %377 = arith.addf %371, %376 : vector<32x16xf32>
      %cst_136 = arith.constant 6.000000e-01 : f32
      %378 = vector.broadcast %cst_136 : f32 to vector<32x16xf32>
      %379 = arith.subf %7, %378 : vector<32x16xf32>
      %cst_137 = arith.constant 0.833333373 : f32
      %380 = vector.broadcast %cst_137 : f32 to vector<32x16xf32>
      %381 = arith.mulf %379, %380 : vector<32x16xf32>
      %382 = arith.mulf %381, %289 : vector<32x16xf32>
      %cst_138 = arith.constant 2.200000e+00 : f32
      %383 = vector.broadcast %cst_138 : f32 to vector<32x16xf32>
      %384 = arith.subf %383, %7 : vector<32x16xf32>
      %cst_139 = arith.constant 0.833333313 : f32
      %385 = vector.broadcast %cst_139 : f32 to vector<32x16xf32>
      %386 = arith.mulf %384, %385 : vector<32x16xf32>
      %387 = arith.mulf %386, %300 : vector<32x16xf32>
      %388 = arith.addf %382, %387 : vector<32x16xf32>
      %c0_140 = arith.constant 0 : index
      %c0_141 = arith.constant 0 : index
      %389 = vector.load %arg5[%c0_140, %c0_141] : memref<32x144xf32, #tpu.memory_space<vmem>>, vector<32x16xf32>
      tpu.vector_store %arg5[%c0_140, %c0_141], %311 {strides = array<i32>} : memref<32x144xf32, #tpu.memory_space<vmem>>, vector<32x16xf32>,
      %c0_142 = arith.constant 0 : index
      %c16 = arith.constant 16 : index
      %390 = vector.load %arg5[%c0_142, %c16] : memref<32x144xf32, #tpu.memory_space<vmem>>, vector<32x16xf32>
      tpu.vector_store %arg5[%c0_142, %c16], %322 {strides = array<i32>} : memref<32x144xf32, #tpu.memory_space<vmem>>, vector<32x16xf32>,
      %c0_143 = arith.constant 0 : index
      %c32 = arith.constant 32 : index
      %391 = vector.load %arg5[%c0_143, %c32] : memref<32x144xf32, #tpu.memory_space<vmem>>, vector<32x16xf32>
      tpu.vector_store %arg5[%c0_143, %c32], %333 {strides = array<i32>} : memref<32x144xf32, #tpu.memory_space<vmem>>, vector<32x16xf32>,
      %c0_144 = arith.constant 0 : index
      %c48 = arith.constant 48 : index
      %392 = vector.load %arg5[%c0_144, %c48] : memref<32x144xf32, #tpu.memory_space<vmem>>, vector<32x16xf32>
      tpu.vector_store %arg5[%c0_144, %c48], %344 {strides = array<i32>} : memref<32x144xf32, #tpu.memory_space<vmem>>, vector<32x16xf32>,
      %c0_145 = arith.constant 0 : index
      %c64 = arith.constant 64 : index
      %393 = vector.load %arg5[%c0_145, %c64] : memref<32x144xf32, #tpu.memory_space<vmem>>, vector<32x16xf32>
      tpu.vector_store %arg5[%c0_145, %c64], %355 {strides = array<i32>} : memref<32x144xf32, #tpu.memory_space<vmem>>, vector<32x16xf32>,
      %c0_146 = arith.constant 0 : index
      %c80 = arith.constant 80 : index
      %394 = vector.load %arg5[%c0_146, %c80] : memref<32x144xf32, #tpu.memory_space<vmem>>, vector<32x16xf32>
      tpu.vector_store %arg5[%c0_146, %c80], %366 {strides = array<i32>} : memref<32x144xf32, #tpu.memory_space<vmem>>, vector<32x16xf32>,
      %c0_147 = arith.constant 0 : index
      %c96 = arith.constant 96 : index
      %395 = vector.load %arg5[%c0_147, %c96] : memref<32x144xf32, #tpu.memory_space<vmem>>, vector<32x16xf32>
      tpu.vector_store %arg5[%c0_147, %c96], %377 {strides = array<i32>} : memref<32x144xf32, #tpu.memory_space<vmem>>, vector<32x16xf32>,
      %c0_148 = arith.constant 0 : index
      %c112 = arith.constant 112 : index
      %396 = vector.load %arg5[%c0_148, %c112] : memref<32x144xf32, #tpu.memory_space<vmem>>, vector<32x16xf32>
      tpu.vector_store %arg5[%c0_148, %c112], %388 {strides = array<i32>} : memref<32x144xf32, #tpu.memory_space<vmem>>, vector<32x16xf32>,
    } else {
    }
    %c0 = arith.constant 0 : index
    %c0_1 = arith.constant 0 : index
    %3 = vector.load %arg5[%c0, %c0_1] : memref<32x144xf32, #tpu.memory_space<vmem>>, vector<32x144xf32>
    %c0_2 = arith.constant 0 : index
    %c0_3 = arith.constant 0 : index
    %4 = vector.load %arg3[%c0_2, %c0_3] : memref<144x128xf32, #tpu.memory_space<vmem>>, vector<144x128xf32>
    %cst = arith.constant dense<0.000000e+00> : vector<32x128xf32>
    %5 = tpu.matmul %3, %4, %cst {dimension_numbers = #tpu.dot_dimension_numbers<[1], [0], [0], [1], [0, 0, 1, 1], [], []>} : vector<32x144xf32>, vector<144x128xf32>, vector<32x128xf32> -> vector<32x128xf32>
    %c0_4 = arith.constant 0 : index
    %c0_5 = arith.constant 0 : index
    %6 = vector.load %arg4[%c0_4, %c0_5] : memref<32x128xf32, #tpu.memory_space<vmem>>, vector<32x128xf32>
    tpu.vector_store %arg4[%c0_4, %c0_5], %5 {strides = array<i32>} : memref<32x128xf32, #tpu.memory_space<vmem>>, vector<32x128xf32>,
    return
  }
  func.func @transform_0(%arg0: i32, %arg1: i32) -> (i32, i32) {
    %c0_i32 = arith.constant 0 : i32
    %c0_i32_0 = arith.constant 0 : i32
    return %arg0, %c0_i32 : i32, i32
  }
  func.func @transform_1(%arg0: i32, %arg1: i32) -> (i32, i32) {
    %c0_i32 = arith.constant 0 : i32
    %c0_i32_0 = arith.constant 0 : i32
    return %c0_i32, %arg1 : i32, i32
  }
  func.func @transform_2(%arg0: i32, %arg1: i32) -> (i32, i32) {
    %c0_i32 = arith.constant 0 : i32
    return %arg0, %arg1 : i32, i32
  }
}

</mosaic_0001>

<llo_original>
// kernel: tpu_custom_call.1
$region0: #{tpu_custom_call.1}
  #allocation0 [shape = 'u32[]', space=smem, size = 0x4, offset = 0x4, fixed_abs, tag = 'smem constant byte address 0x4 - core index']
  #allocation1 [shape = 'u32[72,128]{1,0:T(1,128)}', space=vmem, size = 0x9000, scoped, tag = 'internal scratch']
  #allocation2 [shape = 'f32[32,144]{1,0:T(8,128)}', space=vmem, size = 0x8000, scoped, tag = 'scratch operand']
  %s0 = inlined_call_operand.vmem [shape: f32[32,16], index: 0, kind: input, shape index: {}]
  %s1 = inlined_call_operand.hbm [shape: f32[144,128], index: 1, kind: input, shape index: {}]
  %s2 = inlined_call_operand.hbm [shape: f32[32,128], index: 2, kind: output, shape index: {}]
  %s3 = sld [smem:[#allocation0]]
  $region26: #{tpu_custom_call.1} parent=0
    _
  %s5 = ssub.s32 1, %s3
  %s6 = scalar_select 0, %s5, %s3
  $region1: #{tpu_custom_call.1} parent=0
    #allocation3 [shape = 'u8[73728]{0}', space=vmem, size = 0x12000, scoped, tag = 'input window, operand 1, single buffered']
    #allocation4 [shape = 's32[1]{0}', space=sflag, size = 0x4, scoped, tag = 'scoped memory for tpu_custom_call.1']
    #allocation5 [shape = 's32[1]{0}', space=sflag, size = 0x4, scoped, tag = 'scoped memory for tpu_custom_call.1']
    #allocation6 [shape = 'u8[16384]{0}', space=vmem, size = 0x4000, scoped, tag = 'output window, operand 0, single buffered']
    %7 = vsyncpa [#allocation4], 0
    %8 = vsyncpa [#allocation5], 0
    // Predicated region
    $region2: #{tpu_custom_call.1} parent=1 // pred_check
      _
    $region3: #{tpu_custom_call.1} parent=1 // pred_check_branch
      %10 = sbr.rel (0) target = $region5
    $region4: #{tpu_custom_call.1} parent=1 // pred_region
      _
    $region5: #{tpu_custom_call.1} parent=1 // pred_fallthru
      _
    // Predicated region
    $region6: #{tpu_custom_call.1} parent=1 // pred_check
      _
    $region7: #{tpu_custom_call.1} parent=1 // pred_check_branch
      %12 = sbr.rel (0) target = $region9
    $region8: #{tpu_custom_call.1} parent=1 // pred_region
      %14 = vsyncadd [#allocation4], 0
      %s15 = sshll.u32 %s1, 4
      %s16 = int_to_ptr.hbm [resolvable:$true] %s15
      %s17 = sshll.u32 [#allocation3], 4
      %s18 = int_to_ptr.vmem [resolvable:$true] %s17
      %23 = dma.hbm_to_vmem [thread:$0]  %s16, 2304, %s18, [#allocation4], 128, 128, 8
    $region9: #{tpu_custom_call.1} parent=1 // pred_fallthru
      _
    // Predicated region
    $region10: #{tpu_custom_call.1} parent=1 // pred_check
      _
    $region11: #{tpu_custom_call.1} parent=1 // pred_check_branch
      %25 = sbr.rel (0) target = $region13
    $region12: #{tpu_custom_call.1} parent=1 // pred_region
      %27 = dma.done [#allocation4], 2304
    $region13: #{tpu_custom_call.1} parent=1 // pred_fallthru
      _
    %p28 = scmp.eq.s32.totalorder 0, 0
    // Predicated region
    $region14: #{tpu_custom_call.1} parent=1 // pred_check
      %p29 = pneg %p28
    $region15: #{tpu_custom_call.1} parent=1 // pred_check_branch
      %31 = sbr.rel (%p29) target = $region17
    $region16: #{tpu_custom_call.1} parent=1 // pred_region
      %v32 = vld [vmem:[%s0] sm:$0xff]
      %v33 = vld [vmem:[%s0 + $0x8] sm:$0xff]
      %v34 = vld [vmem:[%s0 + $0x10] sm:$0xff]
      %v35 = vld [vmem:[%s0 + $0x18] sm:$0xff]
      %v36 = vxor.u32 %v32, 2147483648
      %v37 = vxor.u32 %v33, 2147483648
      %v38 = vxor.u32 %v34, 2147483648
      %v39 = vxor.u32 %v35, 2147483648
      %v40 = vmul.f32 %v36, 1.442695
      %v41 = vpow.pop %v40
      %v42 = vmul.f32 %v37, 1.442695
      %v43 = vpow.pop %v42
      %v44 = vmul.f32 %v38, 1.442695
      %v45 = vpow.pop %v44
      %v46 = vmul.f32 %v39, 1.442695
      %v47 = vpow.pop %v46
      %v48 = vadd.f32 %v41, 1.0
      %v49 = vadd.f32 %v43, 1.0
      %v50 = vadd.f32 %v45, 1.0
      %v51 = vadd.f32 %v47, 1.0
      %v52 = vrcp.pop %v48
      %v53 = vmul.f32 %v48, %v52
      %v54 = vsub.f32 1.0, %v53
      %v55 = vmul.f32 %v52, %v54
      %v56 = vadd.f32 %v52, %v55
      %vm57 = vweird.f32 %v48
      %vm58 = vweird.f32 %v52
      %vm59 = vmor %vm57, %vm58
      %v60 = vsel %vm59, %v52, %v56
      %v61 = vand.u32 2147483647, %v48
      %vm62 = vcmp.eq.f32.partialorder %v61, 8.507059e+37
      %v63 = vand.u32 %v48, 2147483648
      %v64 = vor.u32 1.1754944e-38, %v63
      %v65 = vsel %vm62, %v64, %v60
      %v66 = vmul.f32 1.0, %v65
      %v67 = vrcp.pop %v49
      %v68 = vmul.f32 %v49, %v67
      %v69 = vsub.f32 1.0, %v68
      %v70 = vmul.f32 %v67, %v69
      %v71 = vadd.f32 %v67, %v70
      %vm72 = vweird.f32 %v49
      %vm73 = vweird.f32 %v67
      %vm74 = vmor %vm72, %vm73
      %v75 = vsel %vm74, %v67, %v71
      %v76 = vand.u32 2147483647, %v49
      %vm77 = vcmp.eq.f32.partialorder %v76, 8.507059e+37
      %v78 = vand.u32 %v49, 2147483648
      %v79 = vor.u32 1.1754944e-38, %v78
      %v80 = vsel %vm77, %v79, %v75
      %v81 = vmul.f32 1.0, %v80
      %v82 = vrcp.pop %v50
      %v83 = vmul.f32 %v50, %v82
      %v84 = vsub.f32 1.0, %v83
      %v85 = vmul.f32 %v82, %v84
      %v86 = vadd.f32 %v82, %v85
      %vm87 = vweird.f32 %v50
      %vm88 = vweird.f32 %v82
      %vm89 = vmor %vm87, %vm88
      %v90 = vsel %vm89, %v82, %v86
      %v91 = vand.u32 2147483647, %v50
      %vm92 = vcmp.eq.f32.partialorder %v91, 8.507059e+37
      %v93 = vand.u32 %v50, 2147483648
      %v94 = vor.u32 1.1754944e-38, %v93
      %v95 = vsel %vm92, %v94, %v90
      %v96 = vmul.f32 1.0, %v95
      %v97 = vrcp.pop %v51
      %v98 = vmul.f32 %v51, %v97
      %v99 = vsub.f32 1.0, %v98
      %v100 = vmul.f32 %v97, %v99
      %v101 = vadd.f32 %v97, %v100
      %vm102 = vweird.f32 %v51
      %vm103 = vweird.f32 %v97
      %vm104 = vmor %vm102, %vm103
      %v105 = vsel %vm104, %v97, %v101
      %v106 = vand.u32 2147483647, %v51
      %vm107 = vcmp.eq.f32.partialorder %v106, 8.507059e+37
      %v108 = vand.u32 %v51, 2147483648
      %v109 = vor.u32 1.1754944e-38, %v108
      %v110 = vsel %vm107, %v109, %v105
      %v111 = vmul.f32 1.0, %v110
      %v112 = vmul.f32 %v32, %v66
      %v113 = vmul.f32 %v33, %v81
      %v114 = vmul.f32 %v34, %v96
      %v115 = vmul.f32 %v35, %v111
      %vm116 = vcmask 130048
      %117 = vst.msk [vmem:[#allocation2 + $0x8] sm:$0xff] %vm116, %v112
      %118 = vst.msk [vmem:[#allocation2 + $0x18] sm:$0xff] %vm116, %v113
      %119 = vst.msk [vmem:[#allocation2 + $0x28] sm:$0xff] %vm116, %v114
      %120 = vst.msk [vmem:[#allocation2 + $0x38] sm:$0xff] %vm116, %v115
      %vm121 = vcmp.ge.f32.partialorder %v32, -2.2
      %vm122 = vcmp.ge.f32.partialorder %v33, -2.2
      %vm123 = vcmp.ge.f32.partialorder %v34, -2.2
      %vm124 = vcmp.ge.f32.partialorder %v35, -2.2
      %vm125 = vcmp.lt.f32.partialorder %v32, -1.8
      %vm126 = vcmp.lt.f32.partialorder %v33, -1.8
      %vm127 = vcmp.lt.f32.partialorder %v34, -1.8
      %vm128 = vcmp.lt.f32.partialorder %v35, -1.8
      %vm129 = vmand %vm121, %vm125
      %vm130 = vmand %vm122, %vm126
      %vm131 = vmand %vm123, %vm127
      %vm132 = vmand %vm124, %vm128
      %v133 = vsel %vm129, 1, 0
      %v134 = vsel %vm130, 1, 0
      %v135 = vsel %vm131, 1, 0
      %v136 = vsel %vm132, 1, 0
      %v137 = vcvt.s32.f32 %v133
      %v138 = vcvt.s32.f32 %v134
      %v139 = vcvt.s32.f32 %v135
      %v140 = vcvt.s32.f32 %v136
      %vm141 = vcmp.ge.f32.partialorder %v32, -1.8
      %vm142 = vcmp.ge.f32.partialorder %v33, -1.8
      %vm143 = vcmp.ge.f32.partialorder %v34, -1.8
      %vm144 = vcmp.ge.f32.partialorder %v35, -1.8
      %vm145 = vcmp.lt.f32.partialorder %v32, -1.4
      %vm146 = vcmp.lt.f32.partialorder %v33, -1.4
      %vm147 = vcmp.lt.f32.partialorder %v34, -1.4
      %vm148 = vcmp.lt.f32.partialorder %v35, -1.4
      %vm149 = vmand %vm141, %vm145
      %vm150 = vmand %vm142, %vm146
      %vm151 = vmand %vm143, %vm147
      %vm152 = vmand %vm144, %vm148
      %v153 = vsel %vm149, 1, 0
      %v154 = vsel %vm150, 1, 0
      %v155 = vsel %vm151, 1, 0
      %v156 = vsel %vm152, 1, 0
      %v157 = vcvt.s32.f32 %v153
      %v158 = vcvt.s32.f32 %v154
      %v159 = vcvt.s32.f32 %v155
      %v160 = vcvt.s32.f32 %v156
      %vm161 = vcmp.ge.f32.partialorder %v32, -1.4
      %vm162 = vcmp.ge.f32.partialorder %v33, -1.4
      %vm163 = vcmp.ge.f32.partialorder %v34, -1.4
      %vm164 = vcmp.ge.f32.partialorder %v35, -1.4
      %vm165 = vcmp.lt.f32.partialorder %v32, -1.0
      %vm166 = vcmp.lt.f32.partialorder %v33, -1.0
      %vm167 = vcmp.lt.f32.partialorder %v34, -1.0
      %vm168 = vcmp.lt.f32.partialorder %v35, -1.0
      %vm169 = vmand %vm161, %vm165
      %vm170 = vmand %vm162, %vm166
      %vm171 = vmand %vm163, %vm167
      %vm172 = vmand %vm164, %vm168
      %v173 = vsel %vm169, 1, 0
      %v174 = vsel %vm170, 1, 0
      %v175 = vsel %vm171, 1, 0
      %v176 = vsel %vm172, 1, 0
      %v177 = vcvt.s32.f32 %v173
      %v178 = vcvt.s32.f32 %v174
      %v179 = vcvt.s32.f32 %v175
      %v180 = vcvt.s32.f32 %v176
      %vm181 = vcmp.ge.f32.partialorder %v32, -1.0
      %vm182 = vcmp.ge.f32.partialorder %v33, -1.0
      %vm183 = vcmp.ge.f32.partialorder %v34, -1.0
      %vm184 = vcmp.ge.f32.partialorder %v35, -1.0
      %vm185 = vcmp.lt.f32.partialorder %v32, -0.6
      %vm186 = vcmp.lt.f32.partialorder %v33, -0.6
      %vm187 = vcmp.lt.f32.partialorder %v34, -0.6
      %vm188 = vcmp.lt.f32.partialorder %v35, -0.6
      %vm189 = vmand %vm181, %vm185
      %vm190 = vmand %vm182, %vm186
      %vm191 = vmand %vm183, %vm187
      %vm192 = vmand %vm184, %vm188
      %v193 = vsel %vm189, 1, 0
      %v194 = vsel %vm190, 1, 0
      %v195 = vsel %vm191, 1, 0
      %v196 = vsel %vm192, 1, 0
      %v197 = vcvt.s32.f32 %v193
      %v198 = vcvt.s32.f32 %v194
      %v199 = vcvt.s32.f32 %v195
      %v200 = vcvt.s32.f32 %v196
      %vm201 = vcmp.ge.f32.partialorder %v32, -0.6
      %vm202 = vcmp.ge.f32.partialorder %v33, -0.6
      %vm203 = vcmp.ge.f32.partialorder %v34, -0.6
      %vm204 = vcmp.ge.f32.partialorder %v35, -0.6
      %vm205 = vcmp.lt.f32.partialorder %v32, -0.19999999
      %vm206 = vcmp.lt.f32.partialorder %v33, -0.19999999
      %vm207 = vcmp.lt.f32.partialorder %v34, -0.19999999
      %vm208 = vcmp.lt.f32.partialorder %v35, -0.19999999
      %vm209 = vmand %vm201, %vm205
      %vm210 = vmand %vm202, %vm206
      %vm211 = vmand %vm203, %vm207
      %vm212 = vmand %vm204, %vm208
      %v213 = vsel %vm209, 1, 0
      %v214 = vsel %vm210, 1, 0
      %v215 = vsel %vm211, 1, 0
      %v216 = vsel %vm212, 1, 0
      %v217 = vcvt.s32.f32 %v213
      %v218 = vcvt.s32.f32 %v214
      %v219 = vcvt.s32.f32 %v215
      %v220 = vcvt.s32.f32 %v216
      %vm221 = vcmp.ge.f32.partialorder %v32, -0.19999999
      %vm222 = vcmp.ge.f32.partialorder %v33, -0.19999999
      %vm223 = vcmp.ge.f32.partialorder %v34, -0.19999999
      %vm224 = vcmp.ge.f32.partialorder %v35, -0.19999999
      %vm225 = vcmp.lt.f32.partialorder %v32, 0.20000005
      %vm226 = vcmp.lt.f32.partialorder %v33, 0.20000005
      %vm227 = vcmp.lt.f32.partialorder %v34, 0.20000005
      %vm228 = vcmp.lt.f32.partialorder %v35, 0.20000005
      %vm229 = vmand %vm221, %vm225
      %vm230 = vmand %vm222, %vm226
      %vm231 = vmand %vm223, %vm227
      %vm232 = vmand %vm224, %vm228
      %v233 = vsel %vm229, 1, 0
      %v234 = vsel %vm230, 1, 0
      %v235 = vsel %vm231, 1, 0
      %v236 = vsel %vm232, 1, 0
      %v237 = vcvt.s32.f32 %v233
      %v238 = vcvt.s32.f32 %v234
      %v239 = vcvt.s32.f32 %v235
      %v240 = vcvt.s32.f32 %v236
      %vm241 = vcmp.ge.f32.partialorder %v32, 0.20000005
      %vm242 = vcmp.ge.f32.partialorder %v33, 0.20000005
      %vm243 = vcmp.ge.f32.partialorder %v34, 0.20000005
      %vm244 = vcmp.ge.f32.partialorder %v35, 0.20000005
      %vm245 = vcmp.lt.f32.partialorder %v32, 0.6
      %vm246 = vcmp.lt.f32.partialorder %v33, 0.6
      %vm247 = vcmp.lt.f32.partialorder %v34, 0.6
      %vm248 = vcmp.lt.f32.partialorder %v35, 0.6
      %vm249 = vmand %vm241, %vm245
      %vm250 = vmand %vm242, %vm246
      %vm251 = vmand %vm243, %vm247
      %vm252 = vmand %vm244, %vm248
      %v253 = vsel %vm249, 1, 0
      %v254 = vsel %vm250, 1, 0
      %v255 = vsel %vm251, 1, 0
      %v256 = vsel %vm252, 1, 0
      %v257 = vcvt.s32.f32 %v253
      %v258 = vcvt.s32.f32 %v254
      %v259 = vcvt.s32.f32 %v255
      %v260 = vcvt.s32.f32 %v256
      %vm261 = vcmp.ge.f32.partialorder %v32, 0.6
      %vm262 = vcmp.ge.f32.partialorder %v33, 0.6
      %vm263 = vcmp.ge.f32.partialorder %v34, 0.6
      %vm264 = vcmp.ge.f32.partialorder %v35, 0.6
      %vm265 = vcmp.lt.f32.partialorder %v32, 1.0
      %vm266 = vcmp.lt.f32.partialorder %v33, 1.0
      %vm267 = vcmp.lt.f32.partialorder %v34, 1.0
      %vm268 = vcmp.lt.f32.partialorder %v35, 1.0
      %vm269 = vmand %vm261, %vm265
      %vm270 = vmand %vm262, %vm266
      %vm271 = vmand %vm263, %vm267
      %vm272 = vmand %vm264, %vm268
      %v273 = vsel %vm269, 1, 0
      %v274 = vsel %vm270, 1, 0
      %v275 = vsel %vm271, 1, 0
      %v276 = vsel %vm272, 1, 0
      %v277 = vcvt.s32.f32 %v273
      %v278 = vcvt.s32.f32 %v274
      %v279 = vcvt.s32.f32 %v275
      %v280 = vcvt.s32.f32 %v276
      %vm281 = vcmp.ge.f32.partialorder %v32, 1.0
      %vm282 = vcmp.ge.f32.partialorder %v33, 1.0
      %vm283 = vcmp.ge.f32.partialorder %v34, 1.0
      %vm284 = vcmp.ge.f32.partialorder %v35, 1.0
      %vm285 = vcmp.lt.f32.partialorder %v32, 1.4000001
      %vm286 = vcmp.lt.f32.partialorder %v33, 1.4000001
      %vm287 = vcmp.lt.f32.partialorder %v34, 1.4000001
      %vm288 = vcmp.lt.f32.partialorder %v35, 1.4000001
      %vm289 = vmand %vm281, %vm285
      %vm290 = vmand %vm282, %vm286
      %vm291 = vmand %vm283, %vm287
      %vm292 = vmand %vm284, %vm288
      %v293 = vsel %vm289, 1, 0
      %v294 = vsel %vm290, 1, 0
      %v295 = vsel %vm291, 1, 0
      %v296 = vsel %vm292, 1, 0
      %v297 = vcvt.s32.f32 %v293
      %v298 = vcvt.s32.f32 %v294
      %v299 = vcvt.s32.f32 %v295
      %v300 = vcvt.s32.f32 %v296
      %vm301 = vcmp.ge.f32.partialorder %v32, 1.4000001
      %vm302 = vcmp.ge.f32.partialorder %v33, 1.4000001
      %vm303 = vcmp.ge.f32.partialorder %v34, 1.4000001
      %vm304 = vcmp.ge.f32.partialorder %v35, 1.4000001
      %vm305 = vcmp.lt.f32.partialorder %v32, 1.8
      %vm306 = vcmp.lt.f32.partialorder %v33, 1.8
      %vm307 = vcmp.lt.f32.partialorder %v34, 1.8
      %vm308 = vcmp.lt.f32.partialorder %v35, 1.8
      %vm309 = vmand %vm301, %vm305
      %vm310 = vmand %vm302, %vm306
      %vm311 = vmand %vm303, %vm307
      %vm312 = vmand %vm304, %vm308
      %v313 = vsel %vm309, 1, 0
      %v314 = vsel %vm310, 1, 0
      %v315 = vsel %vm311, 1, 0
      %v316 = vsel %vm312, 1, 0
      %v317 = vcvt.s32.f32 %v313
      %v318 = vcvt.s32.f32 %v314
      %v319 = vcvt.s32.f32 %v315
      %v320 = vcvt.s32.f32 %v316
      %vm321 = vcmp.ge.f32.partialorder %v32, 1.8
      %vm322 = vcmp.ge.f32.partialorder %v33, 1.8
      %vm323 = vcmp.ge.f32.partialorder %v34, 1.8
      %vm324 = vcmp.ge.f32.partialorder %v35, 1.8
      %vm325 = vcmp.lt.f32.partialorder %v32, 2.2
      %vm326 = vcmp.lt.f32.partialorder %v33, 2.2
      %vm327 = vcmp.lt.f32.partialorder %v34, 2.2
      %vm328 = vcmp.lt.f32.partialorder %v35, 2.2
      %vm329 = vmand %vm321, %vm325
      %vm330 = vmand %vm322, %vm326
      %vm331 = vmand %vm323, %vm327
      %vm332 = vmand %vm324, %vm328
      %v333 = vsel %vm329, 1, 0
      %v334 = vsel %vm330, 1, 0
      %v335 = vsel %vm331, 1, 0
      %v336 = vsel %vm332, 1, 0
      %v337 = vcvt.s32.f32 %v333
      %v338 = vcvt.s32.f32 %v334
      %v339 = vcvt.s32.f32 %v335
      %v340 = vcvt.s32.f32 %v336
      %v341 = vsub.f32 %v32, -2.2
      %v342 = vsub.f32 %v33, -2.2
      %v343 = vsub.f32 %v34, -2.2
      %v344 = vsub.f32 %v35, -2.2
      %v345 = vmul.f32 %v341, 2.4999995
      %v346 = vmul.f32 %v342, 2.4999995
      %v347 = vmul.f32 %v343, 2.4999995
      %v348 = vmul.f32 %v344, 2.4999995
      %v349 = vmul.f32 %v345, %v137
      %v350 = vmul.f32 %v346, %v138
      %v351 = vmul.f32 %v347, %v139
      %v352 = vmul.f32 %v348, %v140
      %v353 = vsub.f32 -1.4, %v32
      %v354 = vsub.f32 -1.4, %v33
      %v355 = vsub.f32 -1.4, %v34
      %v356 = vsub.f32 -1.4, %v35
      %v357 = vmul.f32 %v353, 2.5000002
      %v358 = vmul.f32 %v354, 2.5000002
      %v359 = vmul.f32 %v355, 2.5000002
      %v360 = vmul.f32 %v356, 2.5000002
      %v361 = vmul.f32 %v357, %v157
      %v362 = vmul.f32 %v358, %v158
      %v363 = vmul.f32 %v359, %v159
      %v364 = vmul.f32 %v360, %v160
      %v365 = vadd.f32 %v349, %v361
      %v366 = vadd.f32 %v350, %v362
      %v367 = vadd.f32 %v351, %v363
      %v368 = vadd.f32 %v352, %v364
      %v369 = vsub.f32 %v32, -1.8
      %v370 = vsub.f32 %v33, -1.8
      %v371 = vsub.f32 %v34, -1.8
      %v372 = vsub.f32 %v35, -1.8
      %v373 = vmul.f32 %v369, 2.5000002
      %v374 = vmul.f32 %v370, 2.5000002
      %v375 = vmul.f32 %v371, 2.5000002
      %v376 = vmul.f32 %v372, 2.5000002
      %v377 = vmul.f32 %v373, %v157
      %v378 = vmul.f32 %v374, %v158
      %v379 = vmul.f32 %v375, %v159
      %v380 = vmul.f32 %v376, %v160
      %v381 = vsub.f32 -1.0, %v32
      %v382 = vsub.f32 -1.0, %v33
      %v383 = vsub.f32 -1.0, %v34
      %v384 = vsub.f32 -1.0, %v35
      %v385 = vmul.f32 %v381, 2.5000002
      %v386 = vmul.f32 %v382, 2.5000002
      %v387 = vmul.f32 %v383, 2.5000002
      %v388 = vmul.f32 %v384, 2.5000002
      %v389 = vmul.f32 %v385, %v177
      %v390 = vmul.f32 %v386, %v178
      %v391 = vmul.f32 %v387, %v179
      %v392 = vmul.f32 %v388, %v180
      %v393 = vadd.f32 %v377, %v389
      %v394 = vadd.f32 %v378, %v390
      %v395 = vadd.f32 %v379, %v391
      %v396 = vadd.f32 %v380, %v392
      %v397 = vsub.f32 %v32, -1.4
      %v398 = vsub.f32 %v33, -1.4
      %v399 = vsub.f32 %v34, -1.4
      %v400 = vsub.f32 %v35, -1.4
      %v401 = vmul.f32 %v397, 2.5000002
      %v402 = vmul.f32 %v398, 2.5000002
      %v403 = vmul.f32 %v399, 2.5000002
      %v404 = vmul.f32 %v400, 2.5000002
      %v405 = vmul.f32 %v401, %v177
      %v406 = vmul.f32 %v402, %v178
      %v407 = vmul.f32 %v403, %v179
      %v408 = vmul.f32 %v404, %v180
      %v409 = vsub.f32 -0.6, %v32
      %v410 = vsub.f32 -0.6, %v33
      %v411 = vsub.f32 -0.6, %v34
      %v412 = vsub.f32 -0.6, %v35
      %v413 = vmul.f32 %v409, 2.5000002
      %v414 = vmul.f32 %v410, 2.5000002
      %v415 = vmul.f32 %v411, 2.5000002
      %v416 = vmul.f32 %v412, 2.5000002
      %v417 = vmul.f32 %v413, %v197
      %v418 = vmul.f32 %v414, %v198
      %v419 = vmul.f32 %v415, %v199
      %v420 = vmul.f32 %v416, %v200
      %v421 = vadd.f32 %v405, %v417
      %v422 = vadd.f32 %v406, %v418
      %v423 = vadd.f32 %v407, %v419
      %v424 = vadd.f32 %v408, %v420
      %v425 = vsub.f32 %v32, -1.0
      %v426 = vsub.f32 %v33, -1.0
      %v427 = vsub.f32 %v34, -1.0
      %v428 = vsub.f32 %v35, -1.0
      %v429 = vmul.f32 %v425, 2.5000002
      %v430 = vmul.f32 %v426, 2.5000002
      %v431 = vmul.f32 %v427, 2.5000002
      %v432 = vmul.f32 %v428, 2.5000002
      %v433 = vmul.f32 %v429, %v197
      %v434 = vmul.f32 %v430, %v198
      %v435 = vmul.f32 %v431, %v199
      %v436 = vmul.f32 %v432, %v200
      %v437 = vsub.f32 -0.19999999, %v32
      %v438 = vsub.f32 -0.19999999, %v33
      %v439 = vsub.f32 -0.19999999, %v34
      %v440 = vsub.f32 -0.19999999, %v35
      %v441 = vmul.f32 %v437, 2.4999998
      %v442 = vmul.f32 %v438, 2.4999998
      %v443 = vmul.f32 %v439, 2.4999998
      %v444 = vmul.f32 %v440, 2.4999998
      %v445 = vmul.f32 %v441, %v217
      %v446 = vmul.f32 %v442, %v218
      %v447 = vmul.f32 %v443, %v219
      %v448 = vmul.f32 %v444, %v220
      %v449 = vadd.f32 %v433, %v445
      %v450 = vadd.f32 %v434, %v446
      %v451 = vadd.f32 %v435, %v447
      %v452 = vadd.f32 %v436, %v448
      %v453 = vsub.f32 %v32, -0.6
      %v454 = vsub.f32 %v33, -0.6
      %v455 = vsub.f32 %v34, -0.6
      %v456 = vsub.f32 %v35, -0.6
      %v457 = vmul.f32 %v453, 2.4999998
      %v458 = vmul.f32 %v454, 2.4999998
      %v459 = vmul.f32 %v455, 2.4999998
      %v460 = vmul.f32 %v456, 2.4999998
      %v461 = vmul.f32 %v457, %v217
      %v462 = vmul.f32 %v458, %v218
      %v463 = vmul.f32 %v459, %v219
      %v464 = vmul.f32 %v460, %v220
      %v465 = vsub.f32 0.20000005, %v32
      %v466 = vsub.f32 0.20000005, %v33
      %v467 = vsub.f32 0.20000005, %v34
      %v468 = vsub.f32 0.20000005, %v35
      %v469 = vmul.f32 %v465, 2.4999998
      %v470 = vmul.f32 %v466, 2.4999998
      %v471 = vmul.f32 %v467, 2.4999998
      %v472 = vmul.f32 %v468, 2.4999998
      %v473 = vmul.f32 %v469, %v237
      %v474 = vmul.f32 %v470, %v238
      %v475 = vmul.f32 %v471, %v239
      %v476 = vmul.f32 %v472, %v240
      %v477 = vadd.f32 %v461, %v473
      %v478 = vadd.f32 %v462, %v474
      %v479 = vadd.f32 %v463, %v475
      %v480 = vadd.f32 %v464, %v476
      %v481 = vsub.f32 %v32, -0.19999999
      %v482 = vsub.f32 %v33, -0.19999999
      %v483 = vsub.f32 %v34, -0.19999999
      %v484 = vsub.f32 %v35, -0.19999999
      %v485 = vmul.f32 %v481, 2.4999998
      %v486 = vmul.f32 %v482, 2.4999998
      %v487 = vmul.f32 %v483, 2.4999998
      %v488 = vmul.f32 %v484, 2.4999998
      %v489 = vmul.f32 %v485, %v237
      %v490 = vmul.f32 %v486, %v238
      %v491 = vmul.f32 %v487, %v239
      %v492 = vmul.f32 %v488, %v240
      %v493 = vsub.f32 0.6, %v32
      %v494 = vsub.f32 0.6, %v33
      %v495 = vsub.f32 0.6, %v34
      %v496 = vsub.f32 0.6, %v35
      %v497 = vmul.f32 %v493, 2.5000002
      %v498 = vmul.f32 %v494, 2.5000002
      %v499 = vmul.f32 %v495, 2.5000002
      %v500 = vmul.f32 %v496, 2.5000002
      %v501 = vmul.f32 %v497, %v257
      %v502 = vmul.f32 %v498, %v258
      %v503 = vmul.f32 %v499, %v259
      %v504 = vmul.f32 %v500, %v260
      %v505 = vadd.f32 %v489, %v501
      %v506 = vadd.f32 %v490, %v502
      %v507 = vadd.f32 %v491, %v503
      %v508 = vadd.f32 %v492, %v504
      %v509 = vsub.f32 %v32, 0.20000005
      %v510 = vsub.f32 %v33, 0.20000005
      %v511 = vsub.f32 %v34, 0.20000005
      %v512 = vsub.f32 %v35, 0.20000005
      %v513 = vmul.f32 %v509, 2.5000002
      %v514 = vmul.f32 %v510, 2.5000002
      %v515 = vmul.f32 %v511, 2.5000002
      %v516 = vmul.f32 %v512, 2.5000002
      %v517 = vmul.f32 %v513, %v257
      %v518 = vmul.f32 %v514, %v258
      %v519 = vmul.f32 %v515, %v259
      %v520 = vmul.f32 %v516, %v260
      %v521 = vsub.f32 1.0, %v32
      %v522 = vsub.f32 1.0, %v33
      %v523 = vsub.f32 1.0, %v34
      %v524 = vsub.f32 1.0, %v35
      %v525 = vmul.f32 %v521, 2.5000002
      %v526 = vmul.f32 %v522, 2.5000002
      %v527 = vmul.f32 %v523, 2.5000002
      %v528 = vmul.f32 %v524, 2.5000002
      %v529 = vmul.f32 %v525, %v277
      %v530 = vmul.f32 %v526, %v278
      %v531 = vmul.f32 %v527, %v279
      %v532 = vmul.f32 %v528, %v280
      %v533 = vadd.f32 %v517, %v529
      %v534 = vadd.f32 %v518, %v530
      %v535 = vadd.f32 %v519, %v531
      %v536 = vadd.f32 %v520, %v532
      %v537 = vsub.f32 %v32, 0.6
      %v538 = vsub.f32 %v33, 0.6
      %v539 = vsub.f32 %v34, 0.6
      %v540 = vsub.f32 %v35, 0.6
      %v541 = vmul.f32 %v537, 2.5000002
      %v542 = vmul.f32 %v538, 2.5000002
      %v543 = vmul.f32 %v539, 2.5000002
      %v544 = vmul.f32 %v540, 2.5000002
      %v545 = vmul.f32 %v541, %v277
      %v546 = vmul.f32 %v542, %v278
      %v547 = vmul.f32 %v543, %v279
      %v548 = vmul.f32 %v544, %v280
      %v549 = vsub.f32 1.4000001, %v32
      %v550 = vsub.f32 1.4000001, %v33
      %v551 = vsub.f32 1.4000001, %v34
      %v552 = vsub.f32 1.4000001, %v35
      %v553 = vmul.f32 %v549, 2.4999995
      %v554 = vmul.f32 %v550, 2.4999995
      %v555 = vmul.f32 %v551, 2.4999995
      %v556 = vmul.f32 %v552, 2.4999995
      %v557 = vmul.f32 %v553, %v297
      %v558 = vmul.f32 %v554, %v298
      %v559 = vmul.f32 %v555, %v299
      %v560 = vmul.f32 %v556, %v300
      %v561 = vadd.f32 %v545, %v557
      %v562 = vadd.f32 %v546, %v558
      %v563 = vadd.f32 %v547, %v559
      %v564 = vadd.f32 %v548, %v560
      %v565 = vsub.f32 %v32, 1.0
      %v566 = vsub.f32 %v33, 1.0
      %v567 = vsub.f32 %v34, 1.0
      %v568 = vsub.f32 %v35, 1.0
      %v569 = vmul.f32 %v565, 2.4999995
      %v570 = vmul.f32 %v566, 2.4999995
      %v571 = vmul.f32 %v567, 2.4999995
      %v572 = vmul.f32 %v568, 2.4999995
      %v573 = vmul.f32 %v569, %v297
      %v574 = vmul.f32 %v570, %v298
      %v575 = vmul.f32 %v571, %v299
      %v576 = vmul.f32 %v572, %v300
      %v577 = vsub.f32 1.8, %v32
      %v578 = vsub.f32 1.8, %v33
      %v579 = vsub.f32 1.8, %v34
      %v580 = vsub.f32 1.8, %v35
      %v581 = vmul.f32 %v577, 2.500001
      %v582 = vmul.f32 %v578, 2.500001
      %v583 = vmul.f32 %v579, 2.500001
      %v584 = vmul.f32 %v580, 2.500001
      %v585 = vmul.f32 %v581, %v317
      %v586 = vmul.f32 %v582, %v318
      %v587 = vmul.f32 %v583, %v319
      %v588 = vmul.f32 %v584, %v320
      %v589 = vadd.f32 %v573, %v585
      %v590 = vadd.f32 %v574, %v586
      %v591 = vadd.f32 %v575, %v587
      %v592 = vadd.f32 %v576, %v588
      %v593 = vsub.f32 %v32, 1.4000001
      %v594 = vsub.f32 %v33, 1.4000001
      %v595 = vsub.f32 %v34, 1.4000001
      %v596 = vsub.f32 %v35, 1.4000001
      %v597 = vmul.f32 %v593, 2.500001
      %v598 = vmul.f32 %v594, 2.500001
      %v599 = vmul.f32 %v595, 2.500001
      %v600 = vmul.f32 %v596, 2.500001
      %v601 = vmul.f32 %v597, %v317
      %v602 = vmul.f32 %v598, %v318
      %v603 = vmul.f32 %v599, %v319
      %v604 = vmul.f32 %v600, %v320
      %v605 = vsub.f32 2.2, %v32
      %v606 = vsub.f32 2.2, %v33
      %v607 = vsub.f32 2.2, %v34
      %v608 = vsub.f32 2.2, %v35
      %v609 = vmul.f32 %v605, 2.4999995
      %v610 = vmul.f32 %v606, 2.4999995
      %v611 = vmul.f32 %v607, 2.4999995
      %v612 = vmul.f32 %v608, 2.4999995
      %v613 = vmul.f32 %v609, %v337
      %v614 = vmul.f32 %v610, %v338
      %v615 = vmul.f32 %v611, %v339
      %v616 = vmul.f32 %v612, %v340
      %v617 = vadd.f32 %v601, %v613
      %v618 = vadd.f32 %v602, %v614
      %v619 = vadd.f32 %v603, %v615
      %v620 = vadd.f32 %v604, %v616
      %v621 = vmul.f32 %v341, 1.2499999
      %v622 = vmul.f32 %v342, 1.2499999
      %v623 = vmul.f32 %v343, 1.2499999
      %v624 = vmul.f32 %v344, 1.2499999
      %v625 = vmul.f32 %v621, %v365
      %v626 = vmul.f32 %v622, %v366
      %v627 = vmul.f32 %v623, %v367
      %v628 = vmul.f32 %v624, %v368
      %v629 = vmul.f32 %v381, 1.2500001
      %v630 = vmul.f32 %v382, 1.2500001
      %v631 = vmul.f32 %v383, 1.2500001
      %v632 = vmul.f32 %v384, 1.2500001
      %v633 = vmul.f32 %v629, %v393
      %v634 = vmul.f32 %v630, %v394
      %v635 = vmul.f32 %v631, %v395
      %v636 = vmul.f32 %v632, %v396
      %v637 = vadd.f32 %v625, %v633
      %v638 = vadd.f32 %v626, %v634
      %v639 = vadd.f32 %v627, %v635
      %v640 = vadd.f32 %v628, %v636
      %v641 = vmul.f32 %v369, 1.2500001
      %v642 = vmul.f32 %v370, 1.2500001
      %v643 = vmul.f32 %v371, 1.2500001
      %v644 = vmul.f32 %v372, 1.2500001
      %v645 = vmul.f32 %v641, %v393
      %v646 = vmul.f32 %v642, %v394
      %v647 = vmul.f32 %v643, %v395
      %v648 = vmul.f32 %v644, %v396
      %v649 = vmul.f32 %v409, 1.2500001
      %v650 = vmul.f32 %v410, 1.2500001
      %v651 = vmul.f32 %v411, 1.2500001
      %v652 = vmul.f32 %v412, 1.2500001
      %v653 = vmul.f32 %v649, %v421
      %v654 = vmul.f32 %v650, %v422
      %v655 = vmul.f32 %v651, %v423
      %v656 = vmul.f32 %v652, %v424
      %v657 = vadd.f32 %v645, %v653
      %v658 = vadd.f32 %v646, %v654
      %v659 = vadd.f32 %v647, %v655
      %v660 = vadd.f32 %v648, %v656
      %v661 = vmul.f32 %v397, 1.2500001
      %v662 = vmul.f32 %v398, 1.2500001
      %v663 = vmul.f32 %v399, 1.2500001
      %v664 = vmul.f32 %v400, 1.2500001
      %v665 = vmul.f32 %v661, %v421
      %v666 = vmul.f32 %v662, %v422
      %v667 = vmul.f32 %v663, %v423
      %v668 = vmul.f32 %v664, %v424
      %v669 = vmul.f32 %v437, 1.25
      %v670 = vmul.f32 %v438, 1.25
      %v671 = vmul.f32 %v439, 1.25
      %v672 = vmul.f32 %v440, 1.25
      %v673 = vmul.f32 %v669, %v449
      %v674 = vmul.f32 %v670, %v450
      %v675 = vmul.f32 %v671, %v451
      %v676 = vmul.f32 %v672, %v452
      %v677 = vadd.f32 %v665, %v673
      %v678 = vadd.f32 %v666, %v674
      %v679 = vadd.f32 %v667, %v675
      %v680 = vadd.f32 %v668, %v676
      %v681 = vmul.f32 %v425, 1.25
      %v682 = vmul.f32 %v426, 1.25
      %v683 = vmul.f32 %v427, 1.25
      %v684 = vmul.f32 %v428, 1.25
      %v685 = vmul.f32 %v681, %v449
      %v686 = vmul.f32 %v682, %v450
      %v687 = vmul.f32 %v683, %v451
      %v688 = vmul.f32 %v684, %v452
      %v689 = vmul.f32 %v465, 1.2499999
      %v690 = vmul.f32 %v466, 1.2499999
      %v691 = vmul.f32 %v467, 1.2499999
      %v692 = vmul.f32 %v468, 1.2499999
      %v693 = vmul.f32 %v689, %v477
      %v694 = vmul.f32 %v690, %v478
      %v695 = vmul.f32 %v691, %v479
      %v696 = vmul.f32 %v692, %v480
      %v697 = vadd.f32 %v685, %v693
      %v698 = vadd.f32 %v686, %v694
      %v699 = vadd.f32 %v687, %v695
      %v700 = vadd.f32 %v688, %v696
      %v701 = vmul.f32 %v453, 1.2499999
      %v702 = vmul.f32 %v454, 1.2499999
      %v703 = vmul.f32 %v455, 1.2499999
      %v704 = vmul.f32 %v456, 1.2499999
      %v705 = vmul.f32 %v701, %v477
      %v706 = vmul.f32 %v702, %v478
      %v707 = vmul.f32 %v703, %v479
      %v708 = vmul.f32 %v704, %v480
      %v709 = vmul.f32 %v493, 1.25
      %v710 = vmul.f32 %v494, 1.25
      %v711 = vmul.f32 %v495, 1.25
      %v712 = vmul.f32 %v496, 1.25
      %v713 = vmul.f32 %v709, %v505
      %v714 = vmul.f32 %v710, %v506
      %v715 = vmul.f32 %v711, %v507
      %v716 = vmul.f32 %v712, %v508
      %v717 = vadd.f32 %v705, %v713
      %v718 = vadd.f32 %v706, %v714
      %v719 = vadd.f32 %v707, %v715
      %v720 = vadd.f32 %v708, %v716
      %v721 = vmul.f32 %v481, 1.25
      %v722 = vmul.f32 %v482, 1.25
      %v723 = vmul.f32 %v483, 1.25
      %v724 = vmul.f32 %v484, 1.25
      %v725 = vmul.f32 %v721, %v505
      %v726 = vmul.f32 %v722, %v506
      %v727 = vmul.f32 %v723, %v507
      %v728 = vmul.f32 %v724, %v508
      %v729 = vmul.f32 %v521, 1.2500001
      %v730 = vmul.f32 %v522, 1.2500001
      %v731 = vmul.f32 %v523, 1.2500001
      %v732 = vmul.f32 %v524, 1.2500001
      %v733 = vmul.f32 %v729, %v533
      %v734 = vmul.f32 %v730, %v534
      %v735 = vmul.f32 %v731, %v535
      %v736 = vmul.f32 %v732, %v536
      %v737 = vadd.f32 %v725, %v733
      %v738 = vadd.f32 %v726, %v734
      %v739 = vadd.f32 %v727, %v735
      %v740 = vadd.f32 %v728, %v736
      %v741 = vmul.f32 %v509, 1.2500001
      %v742 = vmul.f32 %v510, 1.2500001
      %v743 = vmul.f32 %v511, 1.2500001
      %v744 = vmul.f32 %v512, 1.2500001
      %v745 = vmul.f32 %v741, %v533
      %v746 = vmul.f32 %v742, %v534
      %v747 = vmul.f32 %v743, %v535
      %v748 = vmul.f32 %v744, %v536
      %v749 = vmul.f32 %v549, 1.2499999
      %v750 = vmul.f32 %v550, 1.2499999
      %v751 = vmul.f32 %v551, 1.2499999
      %v752 = vmul.f32 %v552, 1.2499999
      %v753 = vmul.f32 %v749, %v561
      %v754 = vmul.f32 %v750, %v562
      %v755 = vmul.f32 %v751, %v563
      %v756 = vmul.f32 %v752, %v564
      %v757 = vadd.f32 %v745, %v753
      %v758 = vadd.f32 %v746, %v754
      %v759 = vadd.f32 %v747, %v755
      %v760 = vadd.f32 %v748, %v756
      %v761 = vmul.f32 %v537, 1.2499999
      %v762 = vmul.f32 %v538, 1.2499999
      %v763 = vmul.f32 %v539, 1.2499999
      %v764 = vmul.f32 %v540, 1.2499999
      %v765 = vmul.f32 %v761, %v561
      %v766 = vmul.f32 %v762, %v562
      %v767 = vmul.f32 %v763, %v563
      %v768 = vmul.f32 %v764, %v564
      %v769 = vmul.f32 %v577, 1.2500001
      %v770 = vmul.f32 %v578, 1.2500001
      %v771 = vmul.f32 %v579, 1.2500001
      %v772 = vmul.f32 %v580, 1.2500001
      %v773 = vmul.f32 %v769, %v589
      %v774 = vmul.f32 %v770, %v590
      %v775 = vmul.f32 %v771, %v591
      %v776 = vmul.f32 %v772, %v592
      %v777 = vadd.f32 %v765, %v773
      %v778 = vadd.f32 %v766, %v774
      %v779 = vadd.f32 %v767, %v775
      %v780 = vadd.f32 %v768, %v776
      %v781 = vmul.f32 %v565, 1.2500001
      %v782 = vmul.f32 %v566, 1.2500001
      %v783 = vmul.f32 %v567, 1.2500001
      %v784 = vmul.f32 %v568, 1.2500001
      %v785 = vmul.f32 %v781, %v589
      %v786 = vmul.f32 %v782, %v590
      %v787 = vmul.f32 %v783, %v591
      %v788 = vmul.f32 %v784, %v592
      %v789 = vmul.f32 %v605, 1.2500001
      %v790 = vmul.f32 %v606, 1.2500001
      %v791 = vmul.f32 %v607, 1.2500001
      %v792 = vmul.f32 %v608, 1.2500001
      %v793 = vmul.f32 %v789, %v617
      %v794 = vmul.f32 %v790, %v618
      %v795 = vmul.f32 %v791, %v619
      %v796 = vmul.f32 %v792, %v620
      %v797 = vadd.f32 %v785, %v793
      %v798 = vadd.f32 %v786, %v794
      %v799 = vadd.f32 %v787, %v795
      %v800 = vadd.f32 %v788, %v796
      %v801 = vmul.f32 %v341, 0.8333333
      %v802 = vmul.f32 %v342, 0.8333333
      %v803 = vmul.f32 %v343, 0.8333333
      %v804 = vmul.f32 %v344, 0.8333333
      %v805 = vmul.f32 %v801, %v637
      %v806 = vmul.f32 %v802, %v638
      %v807 = vmul.f32 %v803, %v639
      %v808 = vmul.f32 %v804, %v640
      %v809 = vmul.f32 %v409, 0.8333334
      %v810 = vmul.f32 %v410, 0.8333334
      %v811 = vmul.f32 %v411, 0.8333334
      %v812 = vmul.f32 %v412, 0.8333334
      %v813 = vmul.f32 %v809, %v657
      %v814 = vmul.f32 %v810, %v658
      %v815 = vmul.f32 %v811, %v659
      %v816 = vmul.f32 %v812, %v660
      %v817 = vadd.f32 %v805, %v813
      %v818 = vadd.f32 %v806, %v814
      %v819 = vadd.f32 %v807, %v815
      %v820 = vadd.f32 %v808, %v816
      %v821 = vmul.f32 %v369, 0.8333334
      %v822 = vmul.f32 %v370, 0.8333334
      %v823 = vmul.f32 %v371, 0.8333334
      %v824 = vmul.f32 %v372, 0.8333334
      %v825 = vmul.f32 %v821, %v657
      %v826 = vmul.f32 %v822, %v658
      %v827 = vmul.f32 %v823, %v659
      %v828 = vmul.f32 %v824, %v660
      %v829 = vmul.f32 %v437, 0.8333333
      %v830 = vmul.f32 %v438, 0.8333333
      %v831 = vmul.f32 %v439, 0.8333333
      %v832 = vmul.f32 %v440, 0.8333333
      %v833 = vmul.f32 %v829, %v677
      %v834 = vmul.f32 %v830, %v678
      %v835 = vmul.f32 %v831, %v679
      %v836 = vmul.f32 %v832, %v680
      %v837 = vadd.f32 %v825, %v833
      %v838 = vadd.f32 %v826, %v834
      %v839 = vadd.f32 %v827, %v835
      %v840 = vadd.f32 %v828, %v836
      %v841 = vmul.f32 %v397, 0.8333333
      %v842 = vmul.f32 %v398, 0.8333333
      %v843 = vmul.f32 %v399, 0.8333333
      %v844 = vmul.f32 %v400, 0.8333333
      %v845 = vmul.f32 %v841, %v677
      %v846 = vmul.f32 %v842, %v678
      %v847 = vmul.f32 %v843, %v679
      %v848 = vmul.f32 %v844, %v680
      %v849 = vmul.f32 %v465, 0.8333333
      %v850 = vmul.f32 %v466, 0.8333333
      %v851 = vmul.f32 %v467, 0.8333333
      %v852 = vmul.f32 %v468, 0.8333333
      %v853 = vmul.f32 %v849, %v697
      %v854 = vmul.f32 %v850, %v698
      %v855 = vmul.f32 %v851, %v699
      %v856 = vmul.f32 %v852, %v700
      %v857 = vadd.f32 %v845, %v853
      %v858 = vadd.f32 %v846, %v854
      %v859 = vadd.f32 %v847, %v855
      %v860 = vadd.f32 %v848, %v856
      %v861 = vmul.f32 %v425, 0.8333333
      %v862 = vmul.f32 %v426, 0.8333333
      %v863 = vmul.f32 %v427, 0.8333333
      %v864 = vmul.f32 %v428, 0.8333333
      %v865 = vmul.f32 %v861, %v697
      %v866 = vmul.f32 %v862, %v698
      %v867 = vmul.f32 %v863, %v699
      %v868 = vmul.f32 %v864, %v700
      %v869 = vmul.f32 %v493, 0.8333333
      %v870 = vmul.f32 %v494, 0.8333333
      %v871 = vmul.f32 %v495, 0.8333333
      %v872 = vmul.f32 %v496, 0.8333333
      %v873 = vmul.f32 %v869, %v717
      %v874 = vmul.f32 %v870, %v718
      %v875 = vmul.f32 %v871, %v719
      %v876 = vmul.f32 %v872, %v720
      %v877 = vadd.f32 %v865, %v873
      %v878 = vadd.f32 %v866, %v874
      %v879 = vadd.f32 %v867, %v875
      %v880 = vadd.f32 %v868, %v876
      %v881 = vmul.f32 %v453, 0.8333333
      %v882 = vmul.f32 %v454, 0.8333333
      %v883 = vmul.f32 %v455, 0.8333333
      %v884 = vmul.f32 %v456, 0.8333333
      %v885 = vmul.f32 %v881, %v717
      %v886 = vmul.f32 %v882, %v718
      %v887 = vmul.f32 %v883, %v719
      %v888 = vmul.f32 %v884, %v720
      %v889 = vmul.f32 %v521, 0.8333333
      %v890 = vmul.f32 %v522, 0.8333333
      %v891 = vmul.f32 %v523, 0.8333333
      %v892 = vmul.f32 %v524, 0.8333333
      %v893 = vmul.f32 %v889, %v737
      %v894 = vmul.f32 %v890, %v738
      %v895 = vmul.f32 %v891, %v739
      %v896 = vmul.f32 %v892, %v740
      %v897 = vadd.f32 %v885, %v893
      %v898 = vadd.f32 %v886, %v894
      %v899 = vadd.f32 %v887, %v895
      %v900 = vadd.f32 %v888, %v896
      %v901 = vmul.f32 %v481, 0.8333333
      %v902 = vmul.f32 %v482, 0.8333333
      %v903 = vmul.f32 %v483, 0.8333333
      %v904 = vmul.f32 %v484, 0.8333333
      %v905 = vmul.f32 %v901, %v737
      %v906 = vmul.f32 %v902, %v738
      %v907 = vmul.f32 %v903, %v739
      %v908 = vmul.f32 %v904, %v740
      %v909 = vmul.f32 %v549, 0.8333333
      %v910 = vmul.f32 %v550, 0.8333333
      %v911 = vmul.f32 %v551, 0.8333333
      %v912 = vmul.f32 %v552, 0.8333333
      %v913 = vmul.f32 %v909, %v757
      %v914 = vmul.f32 %v910, %v758
      %v915 = vmul.f32 %v911, %v759
      %v916 = vmul.f32 %v912, %v760
      %v917 = vadd.f32 %v905, %v913
      %v918 = vadd.f32 %v906, %v914
      %v919 = vadd.f32 %v907, %v915
      %v920 = vadd.f32 %v908, %v916
      %v921 = vmul.f32 %v509, 0.8333333
      %v922 = vmul.f32 %v510, 0.8333333
      %v923 = vmul.f32 %v511, 0.8333333
      %v924 = vmul.f32 %v512, 0.8333333
      %v925 = vmul.f32 %v921, %v757
      %v926 = vmul.f32 %v922, %v758
      %v927 = vmul.f32 %v923, %v759
      %v928 = vmul.f32 %v924, %v760
      %v929 = vmul.f32 %v577, 0.8333334
      %v930 = vmul.f32 %v578, 0.8333334
      %v931 = vmul.f32 %v579, 0.8333334
      %v932 = vmul.f32 %v580, 0.8333334
      %v933 = vmul.f32 %v929, %v777
      %v934 = vmul.f32 %v930, %v778
      %v935 = vmul.f32 %v931, %v779
      %v936 = vmul.f32 %v932, %v780
      %v937 = vadd.f32 %v925, %v933
      %v938 = vadd.f32 %v926, %v934
      %v939 = vadd.f32 %v927, %v935
      %v940 = vadd.f32 %v928, %v936
      %v941 = vmul.f32 %v537, 0.8333334
      %v942 = vmul.f32 %v538, 0.8333334
      %v943 = vmul.f32 %v539, 0.8333334
      %v944 = vmul.f32 %v540, 0.8333334
      %v945 = vmul.f32 %v941, %v777
      %v946 = vmul.f32 %v942, %v778
      %v947 = vmul.f32 %v943, %v779
      %v948 = vmul.f32 %v944, %v780
      %v949 = vmul.f32 %v605, 0.8333333
      %v950 = vmul.f32 %v606, 0.8333333
      %v951 = vmul.f32 %v607, 0.8333333
      %v952 = vmul.f32 %v608, 0.8333333
      %v953 = vmul.f32 %v949, %v797
      %v954 = vmul.f32 %v950, %v798
      %v955 = vmul.f32 %v951, %v799
      %v956 = vmul.f32 %v952, %v800
      %v957 = vadd.f32 %v945, %v953
      %v958 = vadd.f32 %v946, %v954
      %v959 = vadd.f32 %v947, %v955
      %v960 = vadd.f32 %v948, %v956
      %961 = vst.msk [vmem:[#allocation2] sm:$0xff] %vm116, %v817
      %962 = vst.msk [vmem:[#allocation2 + $0x10] sm:$0xff] %vm116, %v818
      %963 = vst.msk [vmem:[#allocation2 + $0x20] sm:$0xff] %vm116, %v819
      %964 = vst.msk [vmem:[#allocation2 + $0x30] sm:$0xff] %vm116, %v820
      %969 = vrot.lane.b32.xlu0 %v837, 16
      %v970 = vpop.permute.xlu0 %969
      %971 = vrot.lane.b32.xlu0 %v838, 16
      %v972 = vpop.permute.xlu0 %971
      %973 = vrot.lane.b32.xlu0 %v839, 16
      %v974 = vpop.permute.xlu0 %973
      %975 = vrot.lane.b32.xlu0 %v840, 16
      %v976 = vpop.permute.xlu0 %975
      %vm981 = vcmask 261248
      %982 = vst.msk [vmem:[#allocation2] sm:$0xff] %vm981, %v970
      %983 = vst.msk [vmem:[#allocation2 + $0x10] sm:$0xff] %vm981, %v972
      %984 = vst.msk [vmem:[#allocation2 + $0x20] sm:$0xff] %vm981, %v974
      %985 = vst.msk [vmem:[#allocation2 + $0x30] sm:$0xff] %vm981, %v976
      %990 = vrot.lane.b32.xlu0 %v857, 32
      %v991 = vpop.permute.xlu0 %990
      %992 = vrot.lane.b32.xlu0 %v858, 32
      %v993 = vpop.permute.xlu0 %992
      %994 = vrot.lane.b32.xlu0 %v859, 32
      %v995 = vpop.permute.xlu0 %994
      %996 = vrot.lane.b32.xlu0 %v860, 32
      %v997 = vpop.permute.xlu0 %996
      %vm1002 = vcmask 392448
      %1003 = vst.msk [vmem:[#allocation2] sm:$0xff] %vm1002, %v991
      %1004 = vst.msk [vmem:[#allocation2 + $0x10] sm:$0xff] %vm1002, %v993
      %1005 = vst.msk [vmem:[#allocation2 + $0x20] sm:$0xff] %vm1002, %v995
      %1006 = vst.msk [vmem:[#allocation2 + $0x30] sm:$0xff] %vm1002, %v997
      %1011 = vrot.lane.b32.xlu0 %v877, 48
      %v1012 = vpop.permute.xlu0 %1011
      %1013 = vrot.lane.b32.xlu0 %v878, 48
      %v1014 = vpop.permute.xlu0 %1013
      %1015 = vrot.lane.b32.xlu0 %v879, 48
      %v1016 = vpop.permute.xlu0 %1015
      %1017 = vrot.lane.b32.xlu0 %v880, 48
      %v1018 = vpop.permute.xlu0 %1017
      %vm1023 = vcmask 523648
      %1024 = vst.msk [vmem:[#allocation2] sm:$0xff] %vm1023, %v1012
      %1025 = vst.msk [vmem:[#allocation2 + $0x10] sm:$0xff] %vm1023, %v1014
      %1026 = vst.msk [vmem:[#allocation2 + $0x20] sm:$0xff] %vm1023, %v1016
      %1027 = vst.msk [vmem:[#allocation2 + $0x30] sm:$0xff] %vm1023, %v1018
      %1032 = vrot.lane.b32.xlu0 %v897, 64
      %v1033 = vpop.permute.xlu0 %1032
      %1034 = vrot.lane.b32.xlu0 %v898, 64
      %v1035 = vpop.permute.xlu0 %1034
      %1036 = vrot.lane.b32.xlu0 %v899, 64
      %v1037 = vpop.permute.xlu0 %1036
      %1038 = vrot.lane.b32.xlu0 %v900, 64
      %v1039 = vpop.permute.xlu0 %1038
      %vm1044 = vcmask 654848
      %1045 = vst.msk [vmem:[#allocation2] sm:$0xff] %vm1044, %v1033
      %1046 = vst.msk [vmem:[#allocation2 + $0x10] sm:$0xff] %vm1044, %v1035
      %1047 = vst.msk [vmem:[#allocation2 + $0x20] sm:$0xff] %vm1044, %v1037
      %1048 = vst.msk [vmem:[#allocation2 + $0x30] sm:$0xff] %vm1044, %v1039
      %1053 = vrot.lane.b32.xlu0 %v917, 80
      %v1054 = vpop.permute.xlu0 %1053
      %1055 = vrot.lane.b32.xlu0 %v918, 80
      %v1056 = vpop.permute.xlu0 %1055
      %1057 = vrot.lane.b32.xlu0 %v919, 80
      %v1058 = vpop.permute.xlu0 %1057
      %1059 = vrot.lane.b32.xlu0 %v920, 80
      %v1060 = vpop.permute.xlu0 %1059
      %vm1065 = vcmask 786048
      %1066 = vst.msk [vmem:[#allocation2] sm:$0xff] %vm1065, %v1054
      %1067 = vst.msk [vmem:[#allocation2 + $0x10] sm:$0xff] %vm1065, %v1056
      %1068 = vst.msk [vmem:[#allocation2 + $0x20] sm:$0xff] %vm1065, %v1058
      %1069 = vst.msk [vmem:[#allocation2 + $0x30] sm:$0xff] %vm1065, %v1060
      %1074 = vrot.lane.b32.xlu0 %v937, 96
      %v1075 = vpop.permute.xlu0 %1074
      %1076 = vrot.lane.b32.xlu0 %v938, 96
      %v1077 = vpop.permute.xlu0 %1076
      %1078 = vrot.lane.b32.xlu0 %v939, 96
      %v1079 = vpop.permute.xlu0 %1078
      %1080 = vrot.lane.b32.xlu0 %v940, 96
      %v1081 = vpop.permute.xlu0 %1080
      %vm1086 = vcmask 917248
      %1087 = vst.msk [vmem:[#allocation2] sm:$0xff] %vm1086, %v1075
      %1088 = vst.msk [vmem:[#allocation2 + $0x10] sm:$0xff] %vm1086, %v1077
      %1089 = vst.msk [vmem:[#allocation2 + $0x20] sm:$0xff] %vm1086, %v1079
      %1090 = vst.msk [vmem:[#allocation2 + $0x30] sm:$0xff] %vm1086, %v1081
      %1095 = vrot.lane.b32.xlu0 %v957, 112
      %v1096 = vpop.permute.xlu0 %1095
      %1097 = vrot.lane.b32.xlu0 %v958, 112
      %v1098 = vpop.permute.xlu0 %1097
      %1099 = vrot.lane.b32.xlu0 %v959, 112
      %v1100 = vpop.permute.xlu0 %1099
      %1101 = vrot.lane.b32.xlu0 %v960, 112
      %v1102 = vpop.permute.xlu0 %1101
      %vm1107 = vcmask 1048448
      %1108 = vst.msk [vmem:[#allocation2] sm:$0xff] %vm1107, %v1096
      %1109 = vst.msk [vmem:[#allocation2 + $0x10] sm:$0xff] %vm1107, %v1098
      %1110 = vst.msk [vmem:[#allocation2 + $0x20] sm:$0xff] %vm1107, %v1100
      %1111 = vst.msk [vmem:[#allocation2 + $0x30] sm:$0xff] %vm1107, %v1102
    $region17: #{tpu_custom_call.1} parent=1 // pred_fallthru
      _
    %v1112 = vld [vmem:[#allocation2] sm:$0xff]
    %v1113 = vld [vmem:[#allocation2 + $0x8] sm:$0xff]
    %v1114 = vld [vmem:[#allocation2 + $0x10] sm:$0xff]
    %v1115 = vld [vmem:[#allocation2 + $0x18] sm:$0xff]
    %v1116 = vld [vmem:[#allocation2 + $0x20] sm:$0xff]
    %v1117 = vld [vmem:[#allocation2 + $0x28] sm:$0xff]
    %v1118 = vld [vmem:[#allocation2 + $0x30] sm:$0xff]
    %v1119 = vld [vmem:[#allocation2 + $0x38] sm:$0xff]
    %v1120 = vld [vmem:[#allocation3] sm:$0xff]
    %v1121 = vld [vmem:[#allocation3 + $0x8] sm:$0xff]
    %v1122 = vld [vmem:[#allocation3 + $0x10] sm:$0xff]
    %v1123 = vld [vmem:[#allocation3 + $0x18] sm:$0xff]
    %v1124 = vld [vmem:[#allocation3 + $0x20] sm:$0xff]
    %v1125 = vld [vmem:[#allocation3 + $0x28] sm:$0xff]
    %v1126 = vld [vmem:[#allocation3 + $0x30] sm:$0xff]
    %v1127 = vld [vmem:[#allocation3 + $0x38] sm:$0xff]
    %v1128 = vld [vmem:[#allocation3 + $0x40] sm:$0xff]
    %v1129 = vld [vmem:[#allocation3 + $0x48] sm:$0xff]
    %v1130 = vld [vmem:[#allocation3 + $0x50] sm:$0xff]
    %v1131 = vld [vmem:[#allocation3 + $0x58] sm:$0xff]
    %v1132 = vld [vmem:[#allocation3 + $0x60] sm:$0xff]
    %v1133 = vld [vmem:[#allocation3 + $0x68] sm:$0xff]
    %v1134 = vld [vmem:[#allocation3 + $0x70] sm:$0xff]
    %v1135 = vld [vmem:[#allocation3 + $0x78] sm:$0xff]
    %v1136 = vld [vmem:[#allocation3 + $0x80] sm:$0xff]
    %v1137 = vld [vmem:[#allocation3 + $0x88] sm:$0xff]
    %vm1138 = vcmask 130048
    %v1140 = vsel %vm1138, %v1113, 0
    %v1143 = vsel %vm1138, %v1115, 0
    %v1146 = vsel %vm1138, %v1117, 0
    %v1149 = vsel %vm1138, %v1119, 0
    %1151 = vmatpush.msra.mxu0 %v1135
    %1152 = vmatpush.msra.mxu0 %v1134
    %1153 = vmatpush.msra.mxu0 %v1133
    %1154 = vmatpush.msra.mxu0 %v1132
    %1155 = vmatpush.msra.mxu0 %v1131
    %1156 = vmatpush.msra.mxu0 %v1130
    %1157 = vmatpush.msra.mxu0 %v1129
    %1158 = vmatpush.msra.mxu0 %v1128
    %1159 = vmatpush.msra.mxu0 %v1127
    %1160 = vmatpush.msra.mxu0 %v1126
    %1161 = vmatpush.msra.mxu0 %v1125
    %1162 = vmatpush.msra.mxu0 %v1124
    %1163 = vmatpush.msra.mxu0 %v1123
    %1164 = vmatpush.msra.mxu0 %v1122
    %1165 = vmatpush.msra.mxu0 %v1121
    %1166 = vmatpush.msra.mxu0 %v1120
    %1167 = vmatmul.f32.gmra.mxu0 %v1112
    %v1168 = vpop.f32.mrf.mxu0
    %v1169 = vadd.f32 0.0, %v1168
    %1170 = vmatmul.f32.gmra.mxu0 %v1114
    %v1171 = vpop.f32.mrf.mxu0
    %v1172 = vadd.f32 0.0, %v1171
    %1173 = vmatmul.f32.gmra.mxu0 %v1116
    %v1174 = vpop.f32.mrf.mxu0
    %v1175 = vadd.f32 0.0, %v1174
    %1176 = vmatmul.f32.gmra.mxu0 %v1118
    %v1177 = vpop.f32.mrf.mxu0
    %v1178 = vadd.f32 0.0, %v1177
    %1179 = vdwg.mxu0
    %1180 = vmatpush.msra.mxu0 0.0
    %1181 = vmatpush.msra.mxu0 0.0
    %1182 = vmatpush.msra.mxu0 0.0
    %1183 = vmatpush.msra.mxu0 0.0
    %1184 = vmatpush.msra.mxu0 0.0
    %1185 = vmatpush.msra.mxu0 0.0
    %1186 = vmatpush.msra.mxu0 0.0
    %1187 = vmatpush.msra.mxu0 0.0
    %1188 = vmatpush.msra.mxu0 0.0
    %1189 = vmatpush.msra.mxu0 0.0
    %1190 = vmatpush.msra.mxu0 0.0
    %1191 = vmatpush.msra.mxu0 0.0
    %1192 = vmatpush.msra.mxu0 0.0
    %1193 = vmatpush.msra.mxu0 0.0
    %1194 = vmatpush.msra.mxu0 %v1137
    %1195 = vmatpush.msra.mxu0 %v1136
    %1196 = vmatmul.f32.gmra.mxu0 %v1140
    %v1197 = vpop.f32.mrf.mxu0
    %v1198 = vadd.f32 %v1169, %v1197
    %1199 = vmatmul.f32.gmra.mxu0 %v1143
    %v1200 = vpop.f32.mrf.mxu0
    %v1201 = vadd.f32 %v1172, %v1200
    %1202 = vmatmul.f32.gmra.mxu0 %v1146
    %v1203 = vpop.f32.mrf.mxu0
    %v1204 = vadd.f32 %v1175, %v1203
    %1205 = vmatmul.f32.gmra.mxu0 %v1149
    %v1206 = vpop.f32.mrf.mxu0
    %v1207 = vadd.f32 %v1178, %v1206
    %1208 = vdwg.mxu0
    %1209 = vst [vmem:[#allocation6] sm:$0xff] %v1198
    %1210 = vst [vmem:[#allocation6 + $0x8] sm:$0xff] %v1201
    %1211 = vst [vmem:[#allocation6 + $0x10] sm:$0xff] %v1204
    %1212 = vst [vmem:[#allocation6 + $0x18] sm:$0xff] %v1207
    // Predicated region
    $region18: #{tpu_custom_call.1} parent=1 // pred_check
      _
    $region19: #{tpu_custom_call.1} parent=1 // pred_check_branch
      %1214 = sbr.rel (0) target = $region21
    $region20: #{tpu_custom_call.1} parent=1 // pred_region
      %1216 = vsyncadd [#allocation5], 0
      %s1217 = sshll.u32 [#allocation6], 4
      %s1218 = int_to_ptr.vmem [resolvable:$true] %s1217
      %s1219 = sshll.u32 %s2, 4
      %s1220 = int_to_ptr.hbm [resolvable:$true] %s1219
      %1225 = dma.vmem_to_hbm [thread:$0]  %s1218, 512, %s1220, [#allocation5], 128, 128, 8
    $region21: #{tpu_custom_call.1} parent=1 // pred_fallthru
      _
    // Predicated region
    $region22: #{tpu_custom_call.1} parent=1 // pred_check
      _
    $region23: #{tpu_custom_call.1} parent=1 // pred_check_branch
      %1227 = sbr.rel (0) target = $region25
    $region24: #{tpu_custom_call.1} parent=1 // pred_region
      %1229 = dma.done [#allocation5], 512
    $region25: #{tpu_custom_call.1} parent=1 // pred_fallthru
      _
    %1230 = vsyncpa [#allocation4], 1
    %1231 = vsyncpa [#allocation5], 1

</llo_original>
